<compile_context>
chip_gen: v7x
topology: tpu7x:2x2x1
jax: 0.10.0
libtpu: 0.0.40
codegen_flags: <defaults>
</compile_context>

<pallas_src>
import math

import jax
import jax.numpy as jnp
from jax.experimental import pallas as pl
from jax.experimental.pallas import tpu as pltpu

LANE = 128                 # lane-dense slab width (all feature dims padded to this)
CDT = jnp.bfloat16         # MXU-native compute dtype for matmul operands (f32 accumulate)


# ----------------------------- small numeric helpers (used in kernel AND reference) -------
def _sigmoid(x):
    return 1.0 / (1.0 + jnp.exp(-x))


def _softplus(x):
    # numerically stable softplus built only from exp/log/abs/max (Mosaic-friendly)
    return jnp.maximum(x, 0.0) + jnp.log(1.0 + jnp.exp(-jnp.abs(x)))


def _mxu_dot(a, b):
    # bf16 operands, f32 accumulation on the MXU
    return jnp.dot(a.astype(CDT), b.astype(CDT), preferred_element_type=jnp.float32)


# ----------------------------------------- fused kernel -----------------------------------
def _build_lstm_encoder_kernel(seq_len, batch_pad, out_size, num_mlp_layers):
    """Kernel closure over the static shapes (T, BP, output_size, #MLP layers)."""
    T, BP = seq_len, batch_pad

    def kernel(x_ref, tsel_ref, wmlp_ref, bmlp_ref, wih_ref, bihh_ref, whh_ref,
               wlast_ref, blast_ref, out_ref, stats_ref):
        f32 = jnp.float32

        # ---- fused MLP over all T*BP timestep rows (Linear -> ReLU per layer) ----
        h = x_ref[...]                                            # (T*BP, LANE) bf16
        for l in range(num_mlp_layers):
            h = jnp.maximum(_mxu_dot(h, wmlp_ref[l]) + bmlp_ref[l], 0.0)

        # ---- input half of the LSTM gates for ALL steps, hoisted out of the recurrence.
        #      Gate g lives in its own 128-lane slab [g*LANE, g*LANE+H); padding lanes have
        #      zero weight AND zero bias, so sigmoid(0)=0.5 / tanh(0)=0 keeps the padding
        #      lanes of c and h exactly zero through the whole recurrence.
        gates_x = _mxu_dot(h, wih_ref[...]) + bihh_ref[...]       # (T*BP, 4*LANE) f32
        whh = whh_ref[...]                                        # hoist recurrent weight
        tsel = tsel_ref[...]                                      # (BP, LANE): last valid step

        # ---- LSTM recurrence (T is small & static -> fully unrolled, all slices aligned)
        h_t = jnp.zeros((BP, LANE), f32)                          # h_{t-1}, zero-padded lanes
        c = jnp.zeros((BP, LANE), f32)
        final = jnp.zeros((BP, LANE), f32)                        # out[b, num[b]-1] selector acc
        for t in range(T):
            r0 = t * BP                                           # multiple of 8 -> aligned
            g = gates_x[r0:r0 + BP, :] + _mxu_dot(h_t, whh)       # (BP, 4*LANE) gate pre-act
            i_g = _sigmoid(g[:, 0 * LANE:1 * LANE])               # PyTorch gate order i,f,g,o
            f_g = _sigmoid(g[:, 1 * LANE:2 * LANE])
            g_g = jnp.tanh(g[:, 2 * LANE:3 * LANE])
            o_g = _sigmoid(g[:, 3 * LANE:4 * LANE])
            c = f_g * c + i_g * g_g                               # padding lanes stay 0
            h_t = o_g * jnp.tanh(c)                               # padding lanes stay 0
            out_ref[r0:r0 + BP, :] = h_t                          # unmasked (8,128) store
            final = final + jnp.where(tsel == float(t), h_t, 0.0)  # pick step num[b]-1

        # ---- last_fc + Gaussian head epilogue (still one lane-dense 128 slab) ----
        pre = _mxu_dot(final, wlast_ref[...]) + blast_ref[...]    # (BP, LANE)
        lane = jax.lax.broadcasted_iota(jnp.int32, pre.shape, 1)
        sig = jnp.sqrt(jnp.maximum(_softplus(pre), 1e-7))
        stats_ref[...] = jnp.where(lane < out_size, pre,          # lanes [0,out)      = mu
                                   jnp.where(lane < 2 * out_size, sig, 0.0))  # [out,2out)= sigma

    return kernel


# -------------------------------------- parameters ----------------------------------------
def make_params(key, input_size, hidden_sizes, output_size, init_w=0.003, b_init_value=0.1):
    """PyTorch-layout parameters (deterministic, PRNGKey-driven)."""
    H = hidden_sizes[-1]
    ks = jax.random.split(key, len(hidden_sizes) + 6)
    mlp = []
    in_size = input_size
    for li, next_size in enumerate(hidden_sizes):
        # NOTE: replicates the reference fanin_init exactly as written there
        # (bound = 1/sqrt(size[0]) with size=(out,in)).
        bound = 1.0 / math.sqrt(next_size)
        W = jax.random.uniform(ks[li], (next_size, in_size), jnp.float32, -bound, bound)
        b = jnp.full((next_size,), b_init_value, jnp.float32)
        mlp.append((W, b))
        in_size = next_size
    s = 1.0 / math.sqrt(H)
    j = len(hidden_sizes)
    Wih = jax.random.uniform(ks[j + 0], (4 * H, H), jnp.float32, -s, s)   # gate order i,f,g,o
    Whh = jax.random.uniform(ks[j + 1], (4 * H, H), jnp.float32, -s, s)
    bih = jax.random.uniform(ks[j + 2], (4 * H,), jnp.float32, -s, s)
    bhh = jax.random.uniform(ks[j + 3], (4 * H,), jnp.float32, -s, s)
    Wl = jax.random.uniform(ks[j + 4], (2 * output_size, H), jnp.float32, -init_w, init_w)
    bl = jax.random.uniform(ks[j + 5], (2 * output_size,), jnp.float32, -init_w, init_w)
    return {"input_size": input_size, "hidden_sizes": tuple(hidden_sizes),
            "output_size": output_size, "mlp": mlp,
            "lstm": (Wih, Whh, bih, bhh), "last_fc": (Wl, bl)}


def pack_kernel_params(params):
    """Zero-pad everything to 128-lane slabs; weights pre-cast to bf16, biases stay f32.

    - the torch.flip(history, dims=[-1]) feature flip is folded into the first MLP weight,
    - each LSTM gate is packed into its own 128-lane slab of a (128, 512) weight so the
      kernel's gate slices are lane-aligned.
    """
    H = params["hidden_sizes"][-1]
    out_size = params["output_size"]
    D = params["input_size"]
    assert max(D, *params["hidden_sizes"], 2 * out_size) <= LANE and H <= LANE, \
        "this toy kernel keeps every feature dim inside one 128-lane slab"

    def pad_w(Wt):  # Wt laid out (in, out) so y = x @ Wt
        z = jnp.zeros((LANE, LANE), jnp.float32)
        return z.at[:Wt.shape[0], :Wt.shape[1]].set(Wt)

    def pad_b(b):
        return jnp.zeros((1, LANE), jnp.float32).at[0, :b.shape[0]].set(b)

    ws, bs = [], []
    for li, (W, b) in enumerate(params["mlp"]):
        Wt = W.T
        if li == 0:
            Wt = Wt[::-1, :]          # fold feature flip of the input into layer 0
        ws.append(pad_w(Wt).astype(CDT))
        bs.append(pad_b(b))

    Wih, Whh, bih, bhh = params["lstm"]
    Wl, bl = params["last_fc"]

    def pack_gate_w(Wg):              # (4H, H) -> (LANE, 4*LANE); gate g -> lanes [g*LANE, g*LANE+H)
        z = jnp.zeros((LANE, 4 * LANE), jnp.float32)
        for g in range(4):
            z = z.at[:H, g * LANE:g * LANE + H].set(Wg[g * H:(g + 1) * H, :].T)
        return z.astype(CDT)

    def pack_gate_b(b):
        z = jnp.zeros((1, 4 * LANE), jnp.float32)
        for g in range(4):
            z = z.at[0, g * LANE:g * LANE + H].set(b[g * H:(g + 1) * H])
        return z

    return {"mlp_w": jnp.stack(ws),          # (L, LANE, LANE)   bf16
            "mlp_b": jnp.stack(bs),          # (L, 1, LANE)      f32
            "wih": pack_gate_w(Wih),         # (LANE, 4*LANE)    bf16
            "whh": pack_gate_w(Whh),         # (LANE, 4*LANE)    bf16
            "bihh": pack_gate_b(bih + bhh),  # (1, 4*LANE)       f32
            "wlast": pad_w(Wl.T).astype(CDT), "blast": pad_b(bl)}


# -------------------------------------- forward wrapper -----------------------------------
def lstm_encoder_forward(params, kparams, history, num_history, *,
                         eps=None, is_deterministic=False, kl_div=False):
    D = params["input_size"]
    H = params["hidden_sizes"][-1]
    out_size = params["output_size"]
    L = len(params["hidden_sizes"])

    B = int(num_history.shape[0])
    hist = history.reshape(B, -1, D).astype(jnp.float32)
    T = int(hist.shape[1])
    BP = max(8, ((B + 7) // 8) * 8)          # pad batch to the f32 sublane group

    # cheap data prep in plain JAX: zero rows with t >= num_history
    # (the feature flip is folded into the first packed MLP weight)
    tmask = (jnp.arange(T)[None, :] < num_history[:, None]).astype(jnp.float32)
    xm = hist * tmask[:, :, None]                                  # (B, T, D)

    # pad features -> 128 lanes, batch -> BP rows, flatten time-major (8-row aligned slabs)
    x = jnp.zeros((BP, T, LANE), jnp.float32).at[:B, :, :D].set(xm)
    x_flat = jnp.transpose(x, (1, 0, 2)).reshape(T * BP, LANE).astype(CDT)

    # per-batch last valid step index, broadcast across lanes (padded rows -> -1: never match)
    last_idx = jnp.maximum(num_history, 1) - 1                     # out[b, max(num,1)-1]
    tsel = jnp.full((BP,), -1.0, jnp.float32).at[:B].set(last_idx.astype(jnp.float32))
    tsel = jnp.broadcast_to(tsel[:, None], (BP, LANE))

    kernel = _build_lstm_encoder_kernel(T, BP, out_size, L)

    def _full(shape):
        return pl.BlockSpec(shape, lambda *_, n=len(shape): (0,) * n)

    operands = (x_flat, tsel,
                kparams["mlp_w"], kparams["mlp_b"],
                kparams["wih"], kparams["bihh"], kparams["whh"],
                kparams["wlast"], kparams["blast"])

    out_pad, stats = pl.pallas_call(
        kernel,
        out_shape=(jax.ShapeDtypeStruct((T * BP, LANE), jnp.float32),
                   jax.ShapeDtypeStruct((BP, LANE), jnp.float32)),
        grid=(1,),
        in_specs=[_full(op.shape) for op in operands],
        out_specs=[_full((T * BP, LANE)), _full((BP, LANE))],
        compiler_params=pltpu.CompilerParams(dimension_semantics=("arbitrary",)),
    )(*operands)

    out = jnp.transpose(out_pad.reshape(T, BP, LANE), (1, 0, 2))[:B, :, :H]   # (B, T, H)
    mu = stats[:B, :out_size]
    sigma = stats[:B, out_size:2 * out_size]

    z = mu if (is_deterministic or eps is None) else mu + sigma * eps         # rsample
    if kl_div:
        kl = jnp.mean(jnp.sum(-jnp.log(sigma) + 0.5 * (sigma ** 2 + mu ** 2 - 1.0), axis=-1))
        return z, out, kl
    return z, out


# -------------------------------------- pure-JAX reference --------------------------------
def lstm_encoder_ref(params, history, num_history):
    """Plain-JAX mirror of LSTMEncoder.forward (same bf16-matmul / f32-accumulate convention)."""
    D = params["input_size"]
    H = params["hidden_sizes"][-1]
    out_size = params["output_size"]
    B = int(num_history.shape[0])
    hist = history.reshape(B, -1, D).astype(jnp.float32)
    T = int(hist.shape[1])
    tmask = (jnp.arange(T)[None, :] < num_history[:, None]).astype(jnp.float32)
    h = hist[..., ::-1] * tmask[:, :, None]
    for W, b in params["mlp"]:
        h = jnp.maximum(_mxu_dot(h, W.T) + b, 0.0)
    Wih, Whh, bih, bhh = params["lstm"]
    hs = jnp.zeros((B, H), jnp.float32)
    cs = jnp.zeros((B, H), jnp.float32)
    outs = []
    for t in range(T):
        g = _mxu_dot(h[:, t, :], Wih.T) + bih + _mxu_dot(hs, Whh.T) + bhh
        i_g = _sigmoid(g[:, :H])
        f_g = _sigmoid(g[:, H:2 * H])
        g_g = jnp.tanh(g[:, 2 * H:3 * H])
        o_g = _sigmoid(g[:, 3 * H:])
        cs = f_g * cs + i_g * g_g
        hs = o_g * jnp.tanh(cs)
        outs.append(hs)
    out = jnp.stack(outs, axis=1)                                  # (B, T, H)
    final = out[jnp.arange(B), jnp.maximum(num_history, 1) - 1]
    Wl, bl = params["last_fc"]
    pre = _mxu_dot(final, Wl.T) + bl
    mu = pre[:, :out_size]
    sigma = jnp.sqrt(jnp.maximum(_softplus(pre[:, out_size:]), 1e-7))
    return mu, sigma, out


# ------------------------------------------- demo -----------------------------------------
if __name__ == "__main__":
    key = jax.random.PRNGKey(0)
    B, T, input_size = 3, 8, 32
    hidden_sizes = (64, 32)
    output_size = 8

    kp, kx, ke = jax.random.split(key, 3)
    params = make_params(kp, input_size, hidden_sizes, output_size)
    kparams = pack_kernel_params(params)

    history = jax.random.normal(kx, (B, T * input_size), dtype=jnp.float32)
    num_history = jnp.array([5, 8, 1], dtype=jnp.int32)
    eps = jax.random.normal(ke, (B, output_size), dtype=jnp.float32)

    # deterministic path (z == mu) and stochastic path with explicit rsample noise + KL
    z_det, out_seq = lstm_encoder_forward(params, kparams, history, num_history,
                                          is_deterministic=True)
    z_sto, out_seq2, kl = lstm_encoder_forward(params, kparams, history, num_history,
                                               eps=eps, kl_div=True)
    z_det, out_seq, z_sto, out_seq2, kl = jax.block_until_ready(
        (z_det, out_seq, z_sto, out_seq2, kl))

    mu_ref, sigma_ref, out_ref = lstm_encoder_ref(params, history, num_history)
    kl_ref = jnp.mean(jnp.sum(-jnp.log(sigma_ref)
                              + 0.5 * (sigma_ref ** 2 + mu_ref ** 2 - 1.0), axis=-1))

    assert z_det.shape == (B, output_size)
    assert out_seq.shape == (B, T, hidden_sizes[-1])

    def ok(a, b):
        return bool(jnp.allclose(a, b, atol=2e-3, rtol=2e-3))

    assert ok(z_det, mu_ref), "mu mismatch vs reference"
    assert ok(out_seq, out_ref), "LSTM output sequence mismatch vs reference"
    assert ok(z_sto, mu_ref + sigma_ref * eps), "rsample mismatch vs reference"
    assert ok(kl, kl_ref), "KL divergence mismatch vs reference"

    print("KERNEL_OK")
</pallas_src>

<mosaic_0001>
module attributes {stable_mosaic.version = 11 : i64} {
  func.func @kernel(%arg0: i32, %arg1: memref<64x128xbf16, #tpu.memory_space<vmem>>, %arg2: memref<8x128xf32, #tpu.memory_space<vmem>>, %arg3: memref<2x128x128xbf16, #tpu.memory_space<vmem>>, %arg4: memref<2x1x128xf32, #tpu.memory_space<vmem>>, %arg5: memref<128x512xbf16, #tpu.memory_space<vmem>>, %arg6: memref<1x512xf32, #tpu.memory_space<vmem>>, %arg7: memref<128x512xbf16, #tpu.memory_space<vmem>>, %arg8: memref<128x128xbf16, #tpu.memory_space<vmem>>, %arg9: memref<1x128xf32, #tpu.memory_space<vmem>>, %arg10: memref<64x128xf32, #tpu.memory_space<vmem>>, %arg11: memref<8x128xf32, #tpu.memory_space<vmem>>) attributes {dimension_semantics = [#tpu.dimension_semantics<arbitrary>], iteration_bounds = array<i64: 1>, scalar_prefetch = 0 : i64, scratch_operands = 0 : i64, tpu.core_type = #tpu.core_type<tc>, window_params = [{pipeline_mode = #tpu.pipeline_mode<synchronous>, transform_indices = @transform_0, window_bounds = array<i64: 64, 128>}, {pipeline_mode = #tpu.pipeline_mode<synchronous>, transform_indices = @transform_1, window_bounds = array<i64: 8, 128>}, {pipeline_mode = #tpu.pipeline_mode<synchronous>, transform_indices = @transform_2, window_bounds = array<i64: 2, 128, 128>}, {pipeline_mode = #tpu.pipeline_mode<synchronous>, transform_indices = @transform_3, window_bounds = array<i64: 2, 1, 128>}, {pipeline_mode = #tpu.pipeline_mode<synchronous>, transform_indices = @transform_4, window_bounds = array<i64: 128, 512>}, {pipeline_mode = #tpu.pipeline_mode<synchronous>, transform_indices = @transform_5, window_bounds = array<i64: 1, 512>}, {pipeline_mode = #tpu.pipeline_mode<synchronous>, transform_indices = @transform_6, window_bounds = array<i64: 128, 512>}, {pipeline_mode = #tpu.pipeline_mode<synchronous>, transform_indices = @transform_7, window_bounds = array<i64: 128, 128>}, {pipeline_mode = #tpu.pipeline_mode<synchronous>, transform_indices = @transform_8, window_bounds = array<i64: 1, 128>}, {pipeline_mode = #tpu.pipeline_mode<synchronous>, transform_indices = @transform_9, window_bounds = array<i64: 64, 128>}, {pipeline_mode = #tpu.pipeline_mode<synchronous>, transform_indices = @transform_10, window_bounds = array<i64: 8, 128>}]} {
    %c0 = arith.constant 0 : index
    %c0_0 = arith.constant 0 : index
    %0 = vector.load %arg1[%c0, %c0_0] : memref<64x128xbf16, #tpu.memory_space<vmem>>, vector<64x128xbf16>
    %c0_1 = arith.constant 0 : index
    %c0_2 = arith.constant 0 : index
    %c0_3 = arith.constant 0 : index
    %1 = vector.load %arg3[%c0_1, %c0_2, %c0_3] : memref<2x128x128xbf16, #tpu.memory_space<vmem>>, vector<1x128x128xbf16>
    %2 = vector.shape_cast %1 : vector<1x128x128xbf16> to vector<128x128xbf16>
    %cst = arith.constant dense<0.000000e+00> : vector<64x128xf32>
    %3 = tpu.matmul %0, %2, %cst {dimension_numbers = #tpu.dot_dimension_numbers<[1], [0], [0], [1], [0, 0, 1, 1], [], []>} : vector<64x128xbf16>, vector<128x128xbf16>, vector<64x128xf32> -> vector<64x128xf32>
    %c0_4 = arith.constant 0 : index
    %c0_5 = arith.constant 0 : index
    %c0_6 = arith.constant 0 : index
    %4 = vector.load %arg4[%c0_4, %c0_5, %c0_6] : memref<2x1x128xf32, #tpu.memory_space<vmem>>, vector<1x1x128xf32>
    %5 = vector.shape_cast %4 : vector<1x1x128xf32> to vector<1x128xf32>
    %6 = vector.broadcast %5 : vector<1x128xf32> to vector<64x128xf32>
    %7 = arith.addf %3, %6 : vector<64x128xf32>
    %cst_7 = arith.constant 0.000000e+00 : f32
    %8 = vector.broadcast %cst_7 : f32 to vector<64x128xf32>
    %9 = arith.maximumf %7, %8 : vector<64x128xf32>
    %c1 = arith.constant 1 : index
    %c0_8 = arith.constant 0 : index
    %c0_9 = arith.constant 0 : index
    %10 = vector.load %arg3[%c1, %c0_8, %c0_9] : memref<2x128x128xbf16, #tpu.memory_space<vmem>>, vector<1x128x128xbf16>
    %11 = vector.shape_cast %10 : vector<1x128x128xbf16> to vector<128x128xbf16>
    %12 = arith.truncf %9 : vector<64x128xf32> to vector<64x128xbf16>
    %cst_10 = arith.constant dense<0.000000e+00> : vector<64x128xf32>
    %13 = tpu.matmul %12, %11, %cst_10 {dimension_numbers = #tpu.dot_dimension_numbers<[1], [0], [0], [1], [0, 0, 1, 1], [], []>} : vector<64x128xbf16>, vector<128x128xbf16>, vector<64x128xf32> -> vector<64x128xf32>
    %c1_11 = arith.constant 1 : index
    %c0_12 = arith.constant 0 : index
    %c0_13 = arith.constant 0 : index
    %14 = vector.load %arg4[%c1_11, %c0_12, %c0_13] : memref<2x1x128xf32, #tpu.memory_space<vmem>>, vector<1x1x128xf32>
    %15 = vector.shape_cast %14 : vector<1x1x128xf32> to vector<1x128xf32>
    %16 = vector.broadcast %15 : vector<1x128xf32> to vector<64x128xf32>
    %17 = arith.addf %13, %16 : vector<64x128xf32>
    %cst_14 = arith.constant 0.000000e+00 : f32
    %18 = vector.broadcast %cst_14 : f32 to vector<64x128xf32>
    %19 = arith.maximumf %17, %18 : vector<64x128xf32>
    %c0_15 = arith.constant 0 : index
    %c0_16 = arith.constant 0 : index
    %20 = vector.load %arg5[%c0_15, %c0_16] : memref<128x512xbf16, #tpu.memory_space<vmem>>, vector<128x512xbf16>
    %21 = arith.truncf %19 : vector<64x128xf32> to vector<64x128xbf16>
    %cst_17 = arith.constant dense<0.000000e+00> : vector<64x512xf32>
    %22 = tpu.matmul %21, %20, %cst_17 {dimension_numbers = #tpu.dot_dimension_numbers<[1], [0], [0], [1], [0, 0, 1, 1], [], []>} : vector<64x128xbf16>, vector<128x512xbf16>, vector<64x512xf32> -> vector<64x512xf32>
    %c0_18 = arith.constant 0 : index
    %c0_19 = arith.constant 0 : index
    %23 = vector.load %arg6[%c0_18, %c0_19] : memref<1x512xf32, #tpu.memory_space<vmem>>, vector<1x512xf32>
    %24 = vector.broadcast %23 : vector<1x512xf32> to vector<64x512xf32>
    %25 = arith.addf %22, %24 : vector<64x512xf32>
    %c0_20 = arith.constant 0 : index
    %c0_21 = arith.constant 0 : index
    %26 = vector.load %arg7[%c0_20, %c0_21] : memref<128x512xbf16, #tpu.memory_space<vmem>>, vector<128x512xbf16>
    %c0_22 = arith.constant 0 : index
    %c0_23 = arith.constant 0 : index
    %27 = vector.load %arg2[%c0_22, %c0_23] : memref<8x128xf32, #tpu.memory_space<vmem>>, vector<8x128xf32>
    %cst_24 = arith.constant 0.000000e+00 : f32
    %28 = vector.broadcast %cst_24 : f32 to vector<8x128xf32>
    %cst_25 = arith.constant 0.000000e+00 : f32
    %29 = vector.broadcast %cst_25 : f32 to vector<8x128xf32>
    %cst_26 = arith.constant 0.000000e+00 : f32
    %30 = vector.broadcast %cst_26 : f32 to vector<8x128xf32>
    %31 = vector.extract_strided_slice %25 {offsets = [0, 0], sizes = [8, 512], strides = [1, 1]} : vector<64x512xf32> to vector<8x512xf32>
    %32 = arith.truncf %28 : vector<8x128xf32> to vector<8x128xbf16>
    %cst_27 = arith.constant dense<0.000000e+00> : vector<8x512xf32>
    %33 = tpu.matmul %32, %26, %cst_27 {dimension_numbers = #tpu.dot_dimension_numbers<[1], [0], [0], [1], [0, 0, 1, 1], [], []>} : vector<8x128xbf16>, vector<128x512xbf16>, vector<8x512xf32> -> vector<8x512xf32>
    %34 = arith.addf %31, %33 : vector<8x512xf32>
    %35 = vector.extract_strided_slice %34 {offsets = [0, 0], sizes = [8, 128], strides = [1, 1]} : vector<8x512xf32> to vector<8x128xf32>
    %cst_28 = arith.constant 0.000000e+00 : f32
    %36 = vector.broadcast %cst_28 : f32 to vector<8x128xf32>
    %37 = arith.subf %36, %35 : vector<8x128xf32>
    %38 = math.exp %37 : vector<8x128xf32>
    %cst_29 = arith.constant 1.000000e+00 : f32
    %39 = vector.broadcast %cst_29 : f32 to vector<8x128xf32>
    %40 = arith.addf %39, %38 : vector<8x128xf32>
    %cst_30 = arith.constant 1.000000e+00 : f32
    %41 = vector.broadcast %cst_30 : f32 to vector<8x128xf32>
    %42 = arith.divf %41, %40 : vector<8x128xf32>
    %43 = vector.extract_strided_slice %34 {offsets = [0, 128], sizes = [8, 128], strides = [1, 1]} : vector<8x512xf32> to vector<8x128xf32>
    %cst_31 = arith.constant 0.000000e+00 : f32
    %44 = vector.broadcast %cst_31 : f32 to vector<8x128xf32>
    %45 = arith.subf %44, %43 : vector<8x128xf32>
    %46 = math.exp %45 : vector<8x128xf32>
    %cst_32 = arith.constant 1.000000e+00 : f32
    %47 = vector.broadcast %cst_32 : f32 to vector<8x128xf32>
    %48 = arith.addf %47, %46 : vector<8x128xf32>
    %cst_33 = arith.constant 1.000000e+00 : f32
    %49 = vector.broadcast %cst_33 : f32 to vector<8x128xf32>
    %50 = arith.divf %49, %48 : vector<8x128xf32>
    %51 = vector.extract_strided_slice %34 {offsets = [0, 256], sizes = [8, 128], strides = [1, 1]} : vector<8x512xf32> to vector<8x128xf32>
    %52 = math.tanh %51 : vector<8x128xf32>
    %53 = vector.extract_strided_slice %34 {offsets = [0, 384], sizes = [8, 128], strides = [1, 1]} : vector<8x512xf32> to vector<8x128xf32>
    %cst_34 = arith.constant 0.000000e+00 : f32
    %54 = vector.broadcast %cst_34 : f32 to vector<8x128xf32>
    %55 = arith.subf %54, %53 : vector<8x128xf32>
    %56 = math.exp %55 : vector<8x128xf32>
    %cst_35 = arith.constant 1.000000e+00 : f32
    %57 = vector.broadcast %cst_35 : f32 to vector<8x128xf32>
    %58 = arith.addf %57, %56 : vector<8x128xf32>
    %cst_36 = arith.constant 1.000000e+00 : f32
    %59 = vector.broadcast %cst_36 : f32 to vector<8x128xf32>
    %60 = arith.divf %59, %58 : vector<8x128xf32>
    %61 = arith.mulf %50, %29 : vector<8x128xf32>
    %62 = arith.mulf %42, %52 : vector<8x128xf32>
    %63 = arith.addf %61, %62 : vector<8x128xf32>
    %64 = math.tanh %63 : vector<8x128xf32>
    %65 = arith.mulf %60, %64 : vector<8x128xf32>
    %c0_37 = arith.constant 0 : index
    %c0_38 = arith.constant 0 : index
    %66 = vector.load %arg10[%c0_37, %c0_38] : memref<64x128xf32, #tpu.memory_space<vmem>>, vector<8x128xf32>
    tpu.vector_store %arg10[%c0_37, %c0_38], %65 {strides = array<i32>} : memref<64x128xf32, #tpu.memory_space<vmem>>, vector<8x128xf32>,
    %cst_39 = arith.constant 0.000000e+00 : f32
    %67 = vector.broadcast %cst_39 : f32 to vector<8x128xf32>
    %68 = arith.cmpf oeq, %27, %67 : vector<8x128xf32>
    %cst_40 = arith.constant 0.000000e+00 : f32
    %69 = vector.broadcast %cst_40 : f32 to vector<8x128xf32>
    %70 = arith.select %68, %65, %69 : vector<8x128xi1>, vector<8x128xf32>
    %71 = arith.addf %30, %70 : vector<8x128xf32>
    %72 = vector.extract_strided_slice %25 {offsets = [8, 0], sizes = [8, 512], strides = [1, 1]} : vector<64x512xf32> to vector<8x512xf32>
    %73 = arith.truncf %65 : vector<8x128xf32> to vector<8x128xbf16>
    %cst_41 = arith.constant dense<0.000000e+00> : vector<8x512xf32>
    %74 = tpu.matmul %73, %26, %cst_41 {dimension_numbers = #tpu.dot_dimension_numbers<[1], [0], [0], [1], [0, 0, 1, 1], [], []>} : vector<8x128xbf16>, vector<128x512xbf16>, vector<8x512xf32> -> vector<8x512xf32>
    %75 = arith.addf %72, %74 : vector<8x512xf32>
    %76 = vector.extract_strided_slice %75 {offsets = [0, 0], sizes = [8, 128], strides = [1, 1]} : vector<8x512xf32> to vector<8x128xf32>
    %cst_42 = arith.constant 0.000000e+00 : f32
    %77 = vector.broadcast %cst_42 : f32 to vector<8x128xf32>
    %78 = arith.subf %77, %76 : vector<8x128xf32>
    %79 = math.exp %78 : vector<8x128xf32>
    %cst_43 = arith.constant 1.000000e+00 : f32
    %80 = vector.broadcast %cst_43 : f32 to vector<8x128xf32>
    %81 = arith.addf %80, %79 : vector<8x128xf32>
    %cst_44 = arith.constant 1.000000e+00 : f32
    %82 = vector.broadcast %cst_44 : f32 to vector<8x128xf32>
    %83 = arith.divf %82, %81 : vector<8x128xf32>
    %84 = vector.extract_strided_slice %75 {offsets = [0, 128], sizes = [8, 128], strides = [1, 1]} : vector<8x512xf32> to vector<8x128xf32>
    %cst_45 = arith.constant 0.000000e+00 : f32
    %85 = vector.broadcast %cst_45 : f32 to vector<8x128xf32>
    %86 = arith.subf %85, %84 : vector<8x128xf32>
    %87 = math.exp %86 : vector<8x128xf32>
    %cst_46 = arith.constant 1.000000e+00 : f32
    %88 = vector.broadcast %cst_46 : f32 to vector<8x128xf32>
    %89 = arith.addf %88, %87 : vector<8x128xf32>
    %cst_47 = arith.constant 1.000000e+00 : f32
    %90 = vector.broadcast %cst_47 : f32 to vector<8x128xf32>
    %91 = arith.divf %90, %89 : vector<8x128xf32>
    %92 = vector.extract_strided_slice %75 {offsets = [0, 256], sizes = [8, 128], strides = [1, 1]} : vector<8x512xf32> to vector<8x128xf32>
    %93 = math.tanh %92 : vector<8x128xf32>
    %94 = vector.extract_strided_slice %75 {offsets = [0, 384], sizes = [8, 128], strides = [1, 1]} : vector<8x512xf32> to vector<8x128xf32>
    %cst_48 = arith.constant 0.000000e+00 : f32
    %95 = vector.broadcast %cst_48 : f32 to vector<8x128xf32>
    %96 = arith.subf %95, %94 : vector<8x128xf32>
    %97 = math.exp %96 : vector<8x128xf32>
    %cst_49 = arith.constant 1.000000e+00 : f32
    %98 = vector.broadcast %cst_49 : f32 to vector<8x128xf32>
    %99 = arith.addf %98, %97 : vector<8x128xf32>
    %cst_50 = arith.constant 1.000000e+00 : f32
    %100 = vector.broadcast %cst_50 : f32 to vector<8x128xf32>
    %101 = arith.divf %100, %99 : vector<8x128xf32>
    %102 = arith.mulf %91, %63 : vector<8x128xf32>
    %103 = arith.mulf %83, %93 : vector<8x128xf32>
    %104 = arith.addf %102, %103 : vector<8x128xf32>
    %105 = math.tanh %104 : vector<8x128xf32>
    %106 = arith.mulf %101, %105 : vector<8x128xf32>
    %c8 = arith.constant 8 : index
    %c0_51 = arith.constant 0 : index
    %107 = vector.load %arg10[%c8, %c0_51] : memref<64x128xf32, #tpu.memory_space<vmem>>, vector<8x128xf32>
    tpu.vector_store %arg10[%c8, %c0_51], %106 {strides = array<i32>} : memref<64x128xf32, #tpu.memory_space<vmem>>, vector<8x128xf32>,
    %cst_52 = arith.constant 1.000000e+00 : f32
    %108 = vector.broadcast %cst_52 : f32 to vector<8x128xf32>
    %109 = arith.cmpf oeq, %27, %108 : vector<8x128xf32>
    %cst_53 = arith.constant 0.000000e+00 : f32
    %110 = vector.broadcast %cst_53 : f32 to vector<8x128xf32>
    %111 = arith.select %109, %106, %110 : vector<8x128xi1>, vector<8x128xf32>
    %112 = arith.addf %71, %111 : vector<8x128xf32>
    %113 = vector.extract_strided_slice %25 {offsets = [16, 0], sizes = [8, 512], strides = [1, 1]} : vector<64x512xf32> to vector<8x512xf32>
    %114 = arith.truncf %106 : vector<8x128xf32> to vector<8x128xbf16>
    %cst_54 = arith.constant dense<0.000000e+00> : vector<8x512xf32>
    %115 = tpu.matmul %114, %26, %cst_54 {dimension_numbers = #tpu.dot_dimension_numbers<[1], [0], [0], [1], [0, 0, 1, 1], [], []>} : vector<8x128xbf16>, vector<128x512xbf16>, vector<8x512xf32> -> vector<8x512xf32>
    %116 = arith.addf %113, %115 : vector<8x512xf32>
    %117 = vector.extract_strided_slice %116 {offsets = [0, 0], sizes = [8, 128], strides = [1, 1]} : vector<8x512xf32> to vector<8x128xf32>
    %cst_55 = arith.constant 0.000000e+00 : f32
    %118 = vector.broadcast %cst_55 : f32 to vector<8x128xf32>
    %119 = arith.subf %118, %117 : vector<8x128xf32>
    %120 = math.exp %119 : vector<8x128xf32>
    %cst_56 = arith.constant 1.000000e+00 : f32
    %121 = vector.broadcast %cst_56 : f32 to vector<8x128xf32>
    %122 = arith.addf %121, %120 : vector<8x128xf32>
    %cst_57 = arith.constant 1.000000e+00 : f32
    %123 = vector.broadcast %cst_57 : f32 to vector<8x128xf32>
    %124 = arith.divf %123, %122 : vector<8x128xf32>
    %125 = vector.extract_strided_slice %116 {offsets = [0, 128], sizes = [8, 128], strides = [1, 1]} : vector<8x512xf32> to vector<8x128xf32>
    %cst_58 = arith.constant 0.000000e+00 : f32
    %126 = vector.broadcast %cst_58 : f32 to vector<8x128xf32>
    %127 = arith.subf %126, %125 : vector<8x128xf32>
    %128 = math.exp %127 : vector<8x128xf32>
    %cst_59 = arith.constant 1.000000e+00 : f32
    %129 = vector.broadcast %cst_59 : f32 to vector<8x128xf32>
    %130 = arith.addf %129, %128 : vector<8x128xf32>
    %cst_60 = arith.constant 1.000000e+00 : f32
    %131 = vector.broadcast %cst_60 : f32 to vector<8x128xf32>
    %132 = arith.divf %131, %130 : vector<8x128xf32>
    %133 = vector.extract_strided_slice %116 {offsets = [0, 256], sizes = [8, 128], strides = [1, 1]} : vector<8x512xf32> to vector<8x128xf32>
    %134 = math.tanh %133 : vector<8x128xf32>
    %135 = vector.extract_strided_slice %116 {offsets = [0, 384], sizes = [8, 128], strides = [1, 1]} : vector<8x512xf32> to vector<8x128xf32>
    %cst_61 = arith.constant 0.000000e+00 : f32
    %136 = vector.broadcast %cst_61 : f32 to vector<8x128xf32>
    %137 = arith.subf %136, %135 : vector<8x128xf32>
    %138 = math.exp %137 : vector<8x128xf32>
    %cst_62 = arith.constant 1.000000e+00 : f32
    %139 = vector.broadcast %cst_62 : f32 to vector<8x128xf32>
    %140 = arith.addf %139, %138 : vector<8x128xf32>
    %cst_63 = arith.constant 1.000000e+00 : f32
    %141 = vector.broadcast %cst_63 : f32 to vector<8x128xf32>
    %142 = arith.divf %141, %140 : vector<8x128xf32>
    %143 = arith.mulf %132, %104 : vector<8x128xf32>
    %144 = arith.mulf %124, %134 : vector<8x128xf32>
    %145 = arith.addf %143, %144 : vector<8x128xf32>
    %146 = math.tanh %145 : vector<8x128xf32>
    %147 = arith.mulf %142, %146 : vector<8x128xf32>
    %c16 = arith.constant 16 : index
    %c0_64 = arith.constant 0 : index
    %148 = vector.load %arg10[%c16, %c0_64] : memref<64x128xf32, #tpu.memory_space<vmem>>, vector<8x128xf32>
    tpu.vector_store %arg10[%c16, %c0_64], %147 {strides = array<i32>} : memref<64x128xf32, #tpu.memory_space<vmem>>, vector<8x128xf32>,
    %cst_65 = arith.constant 2.000000e+00 : f32
    %149 = vector.broadcast %cst_65 : f32 to vector<8x128xf32>
    %150 = arith.cmpf oeq, %27, %149 : vector<8x128xf32>
    %cst_66 = arith.constant 0.000000e+00 : f32
    %151 = vector.broadcast %cst_66 : f32 to vector<8x128xf32>
    %152 = arith.select %150, %147, %151 : vector<8x128xi1>, vector<8x128xf32>
    %153 = arith.addf %112, %152 : vector<8x128xf32>
    %154 = vector.extract_strided_slice %25 {offsets = [24, 0], sizes = [8, 512], strides = [1, 1]} : vector<64x512xf32> to vector<8x512xf32>
    %155 = arith.truncf %147 : vector<8x128xf32> to vector<8x128xbf16>
    %cst_67 = arith.constant dense<0.000000e+00> : vector<8x512xf32>
    %156 = tpu.matmul %155, %26, %cst_67 {dimension_numbers = #tpu.dot_dimension_numbers<[1], [0], [0], [1], [0, 0, 1, 1], [], []>} : vector<8x128xbf16>, vector<128x512xbf16>, vector<8x512xf32> -> vector<8x512xf32>
    %157 = arith.addf %154, %156 : vector<8x512xf32>
    %158 = vector.extract_strided_slice %157 {offsets = [0, 0], sizes = [8, 128], strides = [1, 1]} : vector<8x512xf32> to vector<8x128xf32>
    %cst_68 = arith.constant 0.000000e+00 : f32
    %159 = vector.broadcast %cst_68 : f32 to vector<8x128xf32>
    %160 = arith.subf %159, %158 : vector<8x128xf32>
    %161 = math.exp %160 : vector<8x128xf32>
    %cst_69 = arith.constant 1.000000e+00 : f32
    %162 = vector.broadcast %cst_69 : f32 to vector<8x128xf32>
    %163 = arith.addf %162, %161 : vector<8x128xf32>
    %cst_70 = arith.constant 1.000000e+00 : f32
    %164 = vector.broadcast %cst_70 : f32 to vector<8x128xf32>
    %165 = arith.divf %164, %163 : vector<8x128xf32>
    %166 = vector.extract_strided_slice %157 {offsets = [0, 128], sizes = [8, 128], strides = [1, 1]} : vector<8x512xf32> to vector<8x128xf32>
    %cst_71 = arith.constant 0.000000e+00 : f32
    %167 = vector.broadcast %cst_71 : f32 to vector<8x128xf32>
    %168 = arith.subf %167, %166 : vector<8x128xf32>
    %169 = math.exp %168 : vector<8x128xf32>
    %cst_72 = arith.constant 1.000000e+00 : f32
    %170 = vector.broadcast %cst_72 : f32 to vector<8x128xf32>
    %171 = arith.addf %170, %169 : vector<8x128xf32>
    %cst_73 = arith.constant 1.000000e+00 : f32
    %172 = vector.broadcast %cst_73 : f32 to vector<8x128xf32>
    %173 = arith.divf %172, %171 : vector<8x128xf32>
    %174 = vector.extract_strided_slice %157 {offsets = [0, 256], sizes = [8, 128], strides = [1, 1]} : vector<8x512xf32> to vector<8x128xf32>
    %175 = math.tanh %174 : vector<8x128xf32>
    %176 = vector.extract_strided_slice %157 {offsets = [0, 384], sizes = [8, 128], strides = [1, 1]} : vector<8x512xf32> to vector<8x128xf32>
    %cst_74 = arith.constant 0.000000e+00 : f32
    %177 = vector.broadcast %cst_74 : f32 to vector<8x128xf32>
    %178 = arith.subf %177, %176 : vector<8x128xf32>
    %179 = math.exp %178 : vector<8x128xf32>
    %cst_75 = arith.constant 1.000000e+00 : f32
    %180 = vector.broadcast %cst_75 : f32 to vector<8x128xf32>
    %181 = arith.addf %180, %179 : vector<8x128xf32>
    %cst_76 = arith.constant 1.000000e+00 : f32
    %182 = vector.broadcast %cst_76 : f32 to vector<8x128xf32>
    %183 = arith.divf %182, %181 : vector<8x128xf32>
    %184 = arith.mulf %173, %145 : vector<8x128xf32>
    %185 = arith.mulf %165, %175 : vector<8x128xf32>
    %186 = arith.addf %184, %185 : vector<8x128xf32>
    %187 = math.tanh %186 : vector<8x128xf32>
    %188 = arith.mulf %183, %187 : vector<8x128xf32>
    %c24 = arith.constant 24 : index
    %c0_77 = arith.constant 0 : index
    %189 = vector.load %arg10[%c24, %c0_77] : memref<64x128xf32, #tpu.memory_space<vmem>>, vector<8x128xf32>
    tpu.vector_store %arg10[%c24, %c0_77], %188 {strides = array<i32>} : memref<64x128xf32, #tpu.memory_space<vmem>>, vector<8x128xf32>,
    %cst_78 = arith.constant 3.000000e+00 : f32
    %190 = vector.broadcast %cst_78 : f32 to vector<8x128xf32>
    %191 = arith.cmpf oeq, %27, %190 : vector<8x128xf32>
    %cst_79 = arith.constant 0.000000e+00 : f32
    %192 = vector.broadcast %cst_79 : f32 to vector<8x128xf32>
    %193 = arith.select %191, %188, %192 : vector<8x128xi1>, vector<8x128xf32>
    %194 = arith.addf %153, %193 : vector<8x128xf32>
    %195 = vector.extract_strided_slice %25 {offsets = [32, 0], sizes = [8, 512], strides = [1, 1]} : vector<64x512xf32> to vector<8x512xf32>
    %196 = arith.truncf %188 : vector<8x128xf32> to vector<8x128xbf16>
    %cst_80 = arith.constant dense<0.000000e+00> : vector<8x512xf32>
    %197 = tpu.matmul %196, %26, %cst_80 {dimension_numbers = #tpu.dot_dimension_numbers<[1], [0], [0], [1], [0, 0, 1, 1], [], []>} : vector<8x128xbf16>, vector<128x512xbf16>, vector<8x512xf32> -> vector<8x512xf32>
    %198 = arith.addf %195, %197 : vector<8x512xf32>
    %199 = vector.extract_strided_slice %198 {offsets = [0, 0], sizes = [8, 128], strides = [1, 1]} : vector<8x512xf32> to vector<8x128xf32>
    %cst_81 = arith.constant 0.000000e+00 : f32
    %200 = vector.broadcast %cst_81 : f32 to vector<8x128xf32>
    %201 = arith.subf %200, %199 : vector<8x128xf32>
    %202 = math.exp %201 : vector<8x128xf32>
    %cst_82 = arith.constant 1.000000e+00 : f32
    %203 = vector.broadcast %cst_82 : f32 to vector<8x128xf32>
    %204 = arith.addf %203, %202 : vector<8x128xf32>
    %cst_83 = arith.constant 1.000000e+00 : f32
    %205 = vector.broadcast %cst_83 : f32 to vector<8x128xf32>
    %206 = arith.divf %205, %204 : vector<8x128xf32>
    %207 = vector.extract_strided_slice %198 {offsets = [0, 128], sizes = [8, 128], strides = [1, 1]} : vector<8x512xf32> to vector<8x128xf32>
    %cst_84 = arith.constant 0.000000e+00 : f32
    %208 = vector.broadcast %cst_84 : f32 to vector<8x128xf32>
    %209 = arith.subf %208, %207 : vector<8x128xf32>
    %210 = math.exp %209 : vector<8x128xf32>
    %cst_85 = arith.constant 1.000000e+00 : f32
    %211 = vector.broadcast %cst_85 : f32 to vector<8x128xf32>
    %212 = arith.addf %211, %210 : vector<8x128xf32>
    %cst_86 = arith.constant 1.000000e+00 : f32
    %213 = vector.broadcast %cst_86 : f32 to vector<8x128xf32>
    %214 = arith.divf %213, %212 : vector<8x128xf32>
    %215 = vector.extract_strided_slice %198 {offsets = [0, 256], sizes = [8, 128], strides = [1, 1]} : vector<8x512xf32> to vector<8x128xf32>
    %216 = math.tanh %215 : vector<8x128xf32>
    %217 = vector.extract_strided_slice %198 {offsets = [0, 384], sizes = [8, 128], strides = [1, 1]} : vector<8x512xf32> to vector<8x128xf32>
    %cst_87 = arith.constant 0.000000e+00 : f32
    %218 = vector.broadcast %cst_87 : f32 to vector<8x128xf32>
    %219 = arith.subf %218, %217 : vector<8x128xf32>
    %220 = math.exp %219 : vector<8x128xf32>
    %cst_88 = arith.constant 1.000000e+00 : f32
    %221 = vector.broadcast %cst_88 : f32 to vector<8x128xf32>
    %222 = arith.addf %221, %220 : vector<8x128xf32>
    %cst_89 = arith.constant 1.000000e+00 : f32
    %223 = vector.broadcast %cst_89 : f32 to vector<8x128xf32>
    %224 = arith.divf %223, %222 : vector<8x128xf32>
    %225 = arith.mulf %214, %186 : vector<8x128xf32>
    %226 = arith.mulf %206, %216 : vector<8x128xf32>
    %227 = arith.addf %225, %226 : vector<8x128xf32>
    %228 = math.tanh %227 : vector<8x128xf32>
    %229 = arith.mulf %224, %228 : vector<8x128xf32>
    %c32 = arith.constant 32 : index
    %c0_90 = arith.constant 0 : index
    %230 = vector.load %arg10[%c32, %c0_90] : memref<64x128xf32, #tpu.memory_space<vmem>>, vector<8x128xf32>
    tpu.vector_store %arg10[%c32, %c0_90], %229 {strides = array<i32>} : memref<64x128xf32, #tpu.memory_space<vmem>>, vector<8x128xf32>,
    %cst_91 = arith.constant 4.000000e+00 : f32
    %231 = vector.broadcast %cst_91 : f32 to vector<8x128xf32>
    %232 = arith.cmpf oeq, %27, %231 : vector<8x128xf32>
    %cst_92 = arith.constant 0.000000e+00 : f32
    %233 = vector.broadcast %cst_92 : f32 to vector<8x128xf32>
    %234 = arith.select %232, %229, %233 : vector<8x128xi1>, vector<8x128xf32>
    %235 = arith.addf %194, %234 : vector<8x128xf32>
    %236 = vector.extract_strided_slice %25 {offsets = [40, 0], sizes = [8, 512], strides = [1, 1]} : vector<64x512xf32> to vector<8x512xf32>
    %237 = arith.truncf %229 : vector<8x128xf32> to vector<8x128xbf16>
    %cst_93 = arith.constant dense<0.000000e+00> : vector<8x512xf32>
    %238 = tpu.matmul %237, %26, %cst_93 {dimension_numbers = #tpu.dot_dimension_numbers<[1], [0], [0], [1], [0, 0, 1, 1], [], []>} : vector<8x128xbf16>, vector<128x512xbf16>, vector<8x512xf32> -> vector<8x512xf32>
    %239 = arith.addf %236, %238 : vector<8x512xf32>
    %240 = vector.extract_strided_slice %239 {offsets = [0, 0], sizes = [8, 128], strides = [1, 1]} : vector<8x512xf32> to vector<8x128xf32>
    %cst_94 = arith.constant 0.000000e+00 : f32
    %241 = vector.broadcast %cst_94 : f32 to vector<8x128xf32>
    %242 = arith.subf %241, %240 : vector<8x128xf32>
    %243 = math.exp %242 : vector<8x128xf32>
    %cst_95 = arith.constant 1.000000e+00 : f32
    %244 = vector.broadcast %cst_95 : f32 to vector<8x128xf32>
    %245 = arith.addf %244, %243 : vector<8x128xf32>
    %cst_96 = arith.constant 1.000000e+00 : f32
    %246 = vector.broadcast %cst_96 : f32 to vector<8x128xf32>
    %247 = arith.divf %246, %245 : vector<8x128xf32>
    %248 = vector.extract_strided_slice %239 {offsets = [0, 128], sizes = [8, 128], strides = [1, 1]} : vector<8x512xf32> to vector<8x128xf32>
    %cst_97 = arith.constant 0.000000e+00 : f32
    %249 = vector.broadcast %cst_97 : f32 to vector<8x128xf32>
    %250 = arith.subf %249, %248 : vector<8x128xf32>
    %251 = math.exp %250 : vector<8x128xf32>
    %cst_98 = arith.constant 1.000000e+00 : f32
    %252 = vector.broadcast %cst_98 : f32 to vector<8x128xf32>
    %253 = arith.addf %252, %251 : vector<8x128xf32>
    %cst_99 = arith.constant 1.000000e+00 : f32
    %254 = vector.broadcast %cst_99 : f32 to vector<8x128xf32>
    %255 = arith.divf %254, %253 : vector<8x128xf32>
    %256 = vector.extract_strided_slice %239 {offsets = [0, 256], sizes = [8, 128], strides = [1, 1]} : vector<8x512xf32> to vector<8x128xf32>
    %257 = math.tanh %256 : vector<8x128xf32>
    %258 = vector.extract_strided_slice %239 {offsets = [0, 384], sizes = [8, 128], strides = [1, 1]} : vector<8x512xf32> to vector<8x128xf32>
    %cst_100 = arith.constant 0.000000e+00 : f32
    %259 = vector.broadcast %cst_100 : f32 to vector<8x128xf32>
    %260 = arith.subf %259, %258 : vector<8x128xf32>
    %261 = math.exp %260 : vector<8x128xf32>
    %cst_101 = arith.constant 1.000000e+00 : f32
    %262 = vector.broadcast %cst_101 : f32 to vector<8x128xf32>
    %263 = arith.addf %262, %261 : vector<8x128xf32>
    %cst_102 = arith.constant 1.000000e+00 : f32
    %264 = vector.broadcast %cst_102 : f32 to vector<8x128xf32>
    %265 = arith.divf %264, %263 : vector<8x128xf32>
    %266 = arith.mulf %255, %227 : vector<8x128xf32>
    %267 = arith.mulf %247, %257 : vector<8x128xf32>
    %268 = arith.addf %266, %267 : vector<8x128xf32>
    %269 = math.tanh %268 : vector<8x128xf32>
    %270 = arith.mulf %265, %269 : vector<8x128xf32>
    %c40 = arith.constant 40 : index
    %c0_103 = arith.constant 0 : index
    %271 = vector.load %arg10[%c40, %c0_103] : memref<64x128xf32, #tpu.memory_space<vmem>>, vector<8x128xf32>
    tpu.vector_store %arg10[%c40, %c0_103], %270 {strides = array<i32>} : memref<64x128xf32, #tpu.memory_space<vmem>>, vector<8x128xf32>,
    %cst_104 = arith.constant 5.000000e+00 : f32
    %272 = vector.broadcast %cst_104 : f32 to vector<8x128xf32>
    %273 = arith.cmpf oeq, %27, %272 : vector<8x128xf32>
    %cst_105 = arith.constant 0.000000e+00 : f32
    %274 = vector.broadcast %cst_105 : f32 to vector<8x128xf32>
    %275 = arith.select %273, %270, %274 : vector<8x128xi1>, vector<8x128xf32>
    %276 = arith.addf %235, %275 : vector<8x128xf32>
    %277 = vector.extract_strided_slice %25 {offsets = [48, 0], sizes = [8, 512], strides = [1, 1]} : vector<64x512xf32> to vector<8x512xf32>
    %278 = arith.truncf %270 : vector<8x128xf32> to vector<8x128xbf16>
    %cst_106 = arith.constant dense<0.000000e+00> : vector<8x512xf32>
    %279 = tpu.matmul %278, %26, %cst_106 {dimension_numbers = #tpu.dot_dimension_numbers<[1], [0], [0], [1], [0, 0, 1, 1], [], []>} : vector<8x128xbf16>, vector<128x512xbf16>, vector<8x512xf32> -> vector<8x512xf32>
    %280 = arith.addf %277, %279 : vector<8x512xf32>
    %281 = vector.extract_strided_slice %280 {offsets = [0, 0], sizes = [8, 128], strides = [1, 1]} : vector<8x512xf32> to vector<8x128xf32>
    %cst_107 = arith.constant 0.000000e+00 : f32
    %282 = vector.broadcast %cst_107 : f32 to vector<8x128xf32>
    %283 = arith.subf %282, %281 : vector<8x128xf32>
    %284 = math.exp %283 : vector<8x128xf32>
    %cst_108 = arith.constant 1.000000e+00 : f32
    %285 = vector.broadcast %cst_108 : f32 to vector<8x128xf32>
    %286 = arith.addf %285, %284 : vector<8x128xf32>
    %cst_109 = arith.constant 1.000000e+00 : f32
    %287 = vector.broadcast %cst_109 : f32 to vector<8x128xf32>
    %288 = arith.divf %287, %286 : vector<8x128xf32>
    %289 = vector.extract_strided_slice %280 {offsets = [0, 128], sizes = [8, 128], strides = [1, 1]} : vector<8x512xf32> to vector<8x128xf32>
    %cst_110 = arith.constant 0.000000e+00 : f32
    %290 = vector.broadcast %cst_110 : f32 to vector<8x128xf32>
    %291 = arith.subf %290, %289 : vector<8x128xf32>
    %292 = math.exp %291 : vector<8x128xf32>
    %cst_111 = arith.constant 1.000000e+00 : f32
    %293 = vector.broadcast %cst_111 : f32 to vector<8x128xf32>
    %294 = arith.addf %293, %292 : vector<8x128xf32>
    %cst_112 = arith.constant 1.000000e+00 : f32
    %295 = vector.broadcast %cst_112 : f32 to vector<8x128xf32>
    %296 = arith.divf %295, %294 : vector<8x128xf32>
    %297 = vector.extract_strided_slice %280 {offsets = [0, 256], sizes = [8, 128], strides = [1, 1]} : vector<8x512xf32> to vector<8x128xf32>
    %298 = math.tanh %297 : vector<8x128xf32>
    %299 = vector.extract_strided_slice %280 {offsets = [0, 384], sizes = [8, 128], strides = [1, 1]} : vector<8x512xf32> to vector<8x128xf32>
    %cst_113 = arith.constant 0.000000e+00 : f32
    %300 = vector.broadcast %cst_113 : f32 to vector<8x128xf32>
    %301 = arith.subf %300, %299 : vector<8x128xf32>
    %302 = math.exp %301 : vector<8x128xf32>
    %cst_114 = arith.constant 1.000000e+00 : f32
    %303 = vector.broadcast %cst_114 : f32 to vector<8x128xf32>
    %304 = arith.addf %303, %302 : vector<8x128xf32>
    %cst_115 = arith.constant 1.000000e+00 : f32
    %305 = vector.broadcast %cst_115 : f32 to vector<8x128xf32>
    %306 = arith.divf %305, %304 : vector<8x128xf32>
    %307 = arith.mulf %296, %268 : vector<8x128xf32>
    %308 = arith.mulf %288, %298 : vector<8x128xf32>
    %309 = arith.addf %307, %308 : vector<8x128xf32>
    %310 = math.tanh %309 : vector<8x128xf32>
    %311 = arith.mulf %306, %310 : vector<8x128xf32>
    %c48 = arith.constant 48 : index
    %c0_116 = arith.constant 0 : index
    %312 = vector.load %arg10[%c48, %c0_116] : memref<64x128xf32, #tpu.memory_space<vmem>>, vector<8x128xf32>
    tpu.vector_store %arg10[%c48, %c0_116], %311 {strides = array<i32>} : memref<64x128xf32, #tpu.memory_space<vmem>>, vector<8x128xf32>,
    %cst_117 = arith.constant 6.000000e+00 : f32
    %313 = vector.broadcast %cst_117 : f32 to vector<8x128xf32>
    %314 = arith.cmpf oeq, %27, %313 : vector<8x128xf32>
    %cst_118 = arith.constant 0.000000e+00 : f32
    %315 = vector.broadcast %cst_118 : f32 to vector<8x128xf32>
    %316 = arith.select %314, %311, %315 : vector<8x128xi1>, vector<8x128xf32>
    %317 = arith.addf %276, %316 : vector<8x128xf32>
    %318 = vector.extract_strided_slice %25 {offsets = [56, 0], sizes = [8, 512], strides = [1, 1]} : vector<64x512xf32> to vector<8x512xf32>
    %319 = arith.truncf %311 : vector<8x128xf32> to vector<8x128xbf16>
    %cst_119 = arith.constant dense<0.000000e+00> : vector<8x512xf32>
    %320 = tpu.matmul %319, %26, %cst_119 {dimension_numbers = #tpu.dot_dimension_numbers<[1], [0], [0], [1], [0, 0, 1, 1], [], []>} : vector<8x128xbf16>, vector<128x512xbf16>, vector<8x512xf32> -> vector<8x512xf32>
    %321 = arith.addf %318, %320 : vector<8x512xf32>
    %322 = vector.extract_strided_slice %321 {offsets = [0, 0], sizes = [8, 128], strides = [1, 1]} : vector<8x512xf32> to vector<8x128xf32>
    %cst_120 = arith.constant 0.000000e+00 : f32
    %323 = vector.broadcast %cst_120 : f32 to vector<8x128xf32>
    %324 = arith.subf %323, %322 : vector<8x128xf32>
    %325 = math.exp %324 : vector<8x128xf32>
    %cst_121 = arith.constant 1.000000e+00 : f32
    %326 = vector.broadcast %cst_121 : f32 to vector<8x128xf32>
    %327 = arith.addf %326, %325 : vector<8x128xf32>
    %cst_122 = arith.constant 1.000000e+00 : f32
    %328 = vector.broadcast %cst_122 : f32 to vector<8x128xf32>
    %329 = arith.divf %328, %327 : vector<8x128xf32>
    %330 = vector.extract_strided_slice %321 {offsets = [0, 128], sizes = [8, 128], strides = [1, 1]} : vector<8x512xf32> to vector<8x128xf32>
    %cst_123 = arith.constant 0.000000e+00 : f32
    %331 = vector.broadcast %cst_123 : f32 to vector<8x128xf32>
    %332 = arith.subf %331, %330 : vector<8x128xf32>
    %333 = math.exp %332 : vector<8x128xf32>
    %cst_124 = arith.constant 1.000000e+00 : f32
    %334 = vector.broadcast %cst_124 : f32 to vector<8x128xf32>
    %335 = arith.addf %334, %333 : vector<8x128xf32>
    %cst_125 = arith.constant 1.000000e+00 : f32
    %336 = vector.broadcast %cst_125 : f32 to vector<8x128xf32>
    %337 = arith.divf %336, %335 : vector<8x128xf32>
    %338 = vector.extract_strided_slice %321 {offsets = [0, 256], sizes = [8, 128], strides = [1, 1]} : vector<8x512xf32> to vector<8x128xf32>
    %339 = math.tanh %338 : vector<8x128xf32>
    %340 = vector.extract_strided_slice %321 {offsets = [0, 384], sizes = [8, 128], strides = [1, 1]} : vector<8x512xf32> to vector<8x128xf32>
    %cst_126 = arith.constant 0.000000e+00 : f32
    %341 = vector.broadcast %cst_126 : f32 to vector<8x128xf32>
    %342 = arith.subf %341, %340 : vector<8x128xf32>
    %343 = math.exp %342 : vector<8x128xf32>
    %cst_127 = arith.constant 1.000000e+00 : f32
    %344 = vector.broadcast %cst_127 : f32 to vector<8x128xf32>
    %345 = arith.addf %344, %343 : vector<8x128xf32>
    %cst_128 = arith.constant 1.000000e+00 : f32
    %346 = vector.broadcast %cst_128 : f32 to vector<8x128xf32>
    %347 = arith.divf %346, %345 : vector<8x128xf32>
    %348 = arith.mulf %337, %309 : vector<8x128xf32>
    %349 = arith.mulf %329, %339 : vector<8x128xf32>
    %350 = arith.addf %348, %349 : vector<8x128xf32>
    %351 = math.tanh %350 : vector<8x128xf32>
    %352 = arith.mulf %347, %351 : vector<8x128xf32>
    %c56 = arith.constant 56 : index
    %c0_129 = arith.constant 0 : index
    %353 = vector.load %arg10[%c56, %c0_129] : memref<64x128xf32, #tpu.memory_space<vmem>>, vector<8x128xf32>
    tpu.vector_store %arg10[%c56, %c0_129], %352 {strides = array<i32>} : memref<64x128xf32, #tpu.memory_space<vmem>>, vector<8x128xf32>,
    %cst_130 = arith.constant 7.000000e+00 : f32
    %354 = vector.broadcast %cst_130 : f32 to vector<8x128xf32>
    %355 = arith.cmpf oeq, %27, %354 : vector<8x128xf32>
    %cst_131 = arith.constant 0.000000e+00 : f32
    %356 = vector.broadcast %cst_131 : f32 to vector<8x128xf32>
    %357 = arith.select %355, %352, %356 : vector<8x128xi1>, vector<8x128xf32>
    %358 = arith.addf %317, %357 : vector<8x128xf32>
    %c0_132 = arith.constant 0 : index
    %c0_133 = arith.constant 0 : index
    %359 = vector.load %arg8[%c0_132, %c0_133] : memref<128x128xbf16, #tpu.memory_space<vmem>>, vector<128x128xbf16>
    %360 = arith.truncf %358 : vector<8x128xf32> to vector<8x128xbf16>
    %cst_134 = arith.constant dense<0.000000e+00> : vector<8x128xf32>
    %361 = tpu.matmul %360, %359, %cst_134 {dimension_numbers = #tpu.dot_dimension_numbers<[1], [0], [0], [1], [0, 0, 1, 1], [], []>} : vector<8x128xbf16>, vector<128x128xbf16>, vector<8x128xf32> -> vector<8x128xf32>
    %c0_135 = arith.constant 0 : index
    %c0_136 = arith.constant 0 : index
    %362 = vector.load %arg9[%c0_135, %c0_136] : memref<1x128xf32, #tpu.memory_space<vmem>>, vector<1x128xf32>
    %363 = vector.broadcast %362 : vector<1x128xf32> to vector<8x128xf32>
    %364 = arith.addf %361, %363 : vector<8x128xf32>
    %365 = tpu.iota {dimensions = array<i32: 1>} : vector<8x128xi32>
    %cst_137 = arith.constant 0.000000e+00 : f32
    %366 = vector.broadcast %cst_137 : f32 to vector<8x128xf32>
    %367 = arith.maximumf %364, %366 : vector<8x128xf32>
    %368 = math.absf %364 : vector<8x128xf32>
    %cst_138 = arith.constant 0.000000e+00 : f32
    %369 = vector.broadcast %cst_138 : f32 to vector<8x128xf32>
    %370 = arith.subf %369, %368 : vector<8x128xf32>
    %371 = math.exp %370 : vector<8x128xf32>
    %cst_139 = arith.constant 1.000000e+00 : f32
    %372 = vector.broadcast %cst_139 : f32 to vector<8x128xf32>
    %373 = arith.addf %372, %371 : vector<8x128xf32>
    %374 = math.log %373 : vector<8x128xf32>
    %375 = arith.addf %367, %374 : vector<8x128xf32>
    %cst_140 = arith.constant 1.000000e-07 : f32
    %376 = vector.broadcast %cst_140 : f32 to vector<8x128xf32>
    %377 = arith.maximumf %375, %376 : vector<8x128xf32>
    %378 = math.sqrt %377 : vector<8x128xf32>
    %c8_i32 = arith.constant 8 : i32
    %379 = vector.broadcast %c8_i32 : i32 to vector<8x128xi32>
    %380 = arith.cmpi slt, %365, %379 : vector<8x128xi32>
    %c16_i32 = arith.constant 16 : i32
    %381 = vector.broadcast %c16_i32 : i32 to vector<8x128xi32>
    %382 = arith.cmpi slt, %365, %381 : vector<8x128xi32>
    %cst_141 = arith.constant 0.000000e+00 : f32
    %383 = vector.broadcast %cst_141 : f32 to vector<8x128xf32>
    %384 = arith.select %382, %378, %383 : vector<8x128xi1>, vector<8x128xf32>
    %385 = arith.select %380, %364, %384 : vector<8x128xi1>, vector<8x128xf32>
    %c0_142 = arith.constant 0 : index
    %c0_143 = arith.constant 0 : index
    %386 = vector.load %arg11[%c0_142, %c0_143] : memref<8x128xf32, #tpu.memory_space<vmem>>, vector<8x128xf32>
    tpu.vector_store %arg11[%c0_142, %c0_143], %385 {strides = array<i32>} : memref<8x128xf32, #tpu.memory_space<vmem>>, vector<8x128xf32>,
    return
  }
  func.func @transform_0(%arg0: i32) -> (i32, i32) {
    %c0_i32 = arith.constant 0 : i32
    %c0_i32_0 = arith.constant 0 : i32
    %c0_i32_1 = arith.constant 0 : i32
    return %c0_i32, %c0_i32_0 : i32, i32
  }
  func.func @transform_1(%arg0: i32) -> (i32, i32) {
    %c0_i32 = arith.constant 0 : i32
    %c0_i32_0 = arith.constant 0 : i32
    %c0_i32_1 = arith.constant 0 : i32
    return %c0_i32, %c0_i32_0 : i32, i32
  }
  func.func @transform_2(%arg0: i32) -> (i32, i32, i32) {
    %c0_i32 = arith.constant 0 : i32
    %c0_i32_0 = arith.constant 0 : i32
    %c0_i32_1 = arith.constant 0 : i32
    %c0_i32_2 = arith.constant 0 : i32
    return %c0_i32, %c0_i32_0, %c0_i32_1 : i32, i32, i32
  }
  func.func @transform_3(%arg0: i32) -> (i32, i32, i32) {
    %c0_i32 = arith.constant 0 : i32
    %c0_i32_0 = arith.constant 0 : i32
    %c0_i32_1 = arith.constant 0 : i32
    %c0_i32_2 = arith.constant 0 : i32
    return %c0_i32, %c0_i32_0, %c0_i32_1 : i32, i32, i32
  }
  func.func @transform_4(%arg0: i32) -> (i32, i32) {
    %c0_i32 = arith.constant 0 : i32
    %c0_i32_0 = arith.constant 0 : i32
    %c0_i32_1 = arith.constant 0 : i32
    return %c0_i32, %c0_i32_0 : i32, i32
  }
  func.func @transform_5(%arg0: i32) -> (i32, i32) {
    %c0_i32 = arith.constant 0 : i32
    %c0_i32_0 = arith.constant 0 : i32
    %c0_i32_1 = arith.constant 0 : i32
    return %c0_i32, %c0_i32_0 : i32, i32
  }
  func.func @transform_6(%arg0: i32) -> (i32, i32) {
    %c0_i32 = arith.constant 0 : i32
    %c0_i32_0 = arith.constant 0 : i32
    %c0_i32_1 = arith.constant 0 : i32
    return %c0_i32, %c0_i32_0 : i32, i32
  }
  func.func @transform_7(%arg0: i32) -> (i32, i32) {
    %c0_i32 = arith.constant 0 : i32
    %c0_i32_0 = arith.constant 0 : i32
    %c0_i32_1 = arith.constant 0 : i32
    return %c0_i32, %c0_i32_0 : i32, i32
  }
  func.func @transform_8(%arg0: i32) -> (i32, i32) {
    %c0_i32 = arith.constant 0 : i32
    %c0_i32_0 = arith.constant 0 : i32
    %c0_i32_1 = arith.constant 0 : i32
    return %c0_i32, %c0_i32_0 : i32, i32
  }
  func.func @transform_9(%arg0: i32) -> (i32, i32) {
    %c0_i32 = arith.constant 0 : i32
    %c0_i32_0 = arith.constant 0 : i32
    %c0_i32_1 = arith.constant 0 : i32
    return %c0_i32, %c0_i32_0 : i32, i32
  }
  func.func @transform_10(%arg0: i32) -> (i32, i32) {
    %c0_i32 = arith.constant 0 : i32
    %c0_i32_0 = arith.constant 0 : i32
    %c0_i32_1 = arith.constant 0 : i32
    return %c0_i32, %c0_i32_0 : i32, i32
  }
}

</mosaic_0001>

<llo_original>
// kernel: tpu_custom_call.1
$region0: #{tpu_custom_call.1}
  #allocation0 [shape = 'u32[]', space=smem, size = 0x4, offset = 0x4, fixed_abs, tag = 'smem constant byte address 0x4 - core index']
  #allocation1 [shape = 'u32[144,128]{1,0:T(1,128)}', space=vmem, size = 0x12000, scoped, tag = 'internal scratch']
  %s0 = inlined_call_operand.hbm [shape: bf16[64,128], index: 0, kind: input, shape index: {}]
  %s1 = inlined_call_operand.hbm [shape: f32[8,128], index: 1, kind: input, shape index: {}]
  %s2 = inlined_call_operand.hbm [shape: bf16[2,128,128], index: 2, kind: input, shape index: {}]
  %s3 = inlined_call_operand.vmem [shape: f32[2,1,128], index: 3, kind: input, shape index: {}]
  %s4 = inlined_call_operand.hbm [shape: bf16[128,512], index: 4, kind: input, shape index: {}]
  %s5 = inlined_call_operand.vmem [shape: f32[1,512], index: 5, kind: input, shape index: {}]
  %s6 = inlined_call_operand.hbm [shape: bf16[128,512], index: 6, kind: input, shape index: {}]
  %s7 = inlined_call_operand.hbm [shape: bf16[128,128], index: 7, kind: input, shape index: {}]
  %s8 = inlined_call_operand.vmem [shape: f32[1,128], index: 8, kind: input, shape index: {}]
  %s9 = inlined_call_operand.hbm [shape: f32[64,128], index: 9, kind: output, shape index: {0}]
  %s10 = inlined_call_operand.hbm [shape: f32[8,128], index: 10, kind: output, shape index: {1}]
  %11 = xla_tuple %s9, %s10
  %s12 = sld [smem:[#allocation0]]
  $region78: #{tpu_custom_call.1} parent=0
    _
  %s14 = ssub.s32 1, %s12
  %s15 = scalar_select 0, %s14, %s12
  $region1: #{tpu_custom_call.1} parent=0
    #allocation2 [shape = 'u8[16384]{0}', space=vmem, size = 0x4000, scoped, tag = 'input window, operand 0, single buffered']
    #allocation3 [shape = 's32[1]{0}', space=sflag, size = 0x4, scoped, tag = 'scoped memory for tpu_custom_call.1']
    #allocation4 [shape = 's32[1]{0}', space=sflag, size = 0x4, scoped, tag = 'scoped memory for tpu_custom_call.1']
    #allocation5 [shape = 'u8[4096]{0}', space=vmem, size = 0x1000, scoped, tag = 'input window, operand 1, single buffered']
    #allocation6 [shape = 's32[1]{0}', space=sflag, size = 0x4, scoped, tag = 'scoped memory for tpu_custom_call.1']
    #allocation7 [shape = 'u8[65536]{0}', space=vmem, size = 0x10000, scoped, tag = 'input window, operand 2, single buffered']
    #allocation8 [shape = 'u8[131072]{0}', space=vmem, size = 0x20000, scoped, tag = 'input window, operand 4, single buffered']
    #allocation9 [shape = 's32[1]{0}', space=sflag, size = 0x4, scoped, tag = 'scoped memory for tpu_custom_call.1']
    #allocation10 [shape = 'u8[131072]{0}', space=vmem, size = 0x20000, scoped, tag = 'input window, operand 6, single buffered']
    #allocation11 [shape = 'u8[32768]{0}', space=vmem, size = 0x8000, scoped, tag = 'input window, operand 7, single buffered']
    #allocation12 [shape = 's32[1]{0}', space=sflag, size = 0x4, scoped, tag = 'scoped memory for tpu_custom_call.1']
    #allocation13 [shape = 'u8[32768]{0}', space=vmem, size = 0x8000, scoped, tag = 'output window, operand 0, single buffered']
    #allocation14 [shape = 'u8[4096]{0}', space=vmem, size = 0x1000, scoped, tag = 'output window, operand 1, single buffered']
    #allocation15 [shape = 's32[1]{0}', space=sflag, size = 0x4, scoped, tag = 'scoped memory for tpu_custom_call.1']
    %16 = vsyncpa [#allocation3], 0
    %17 = vsyncpa [#allocation6], 0
    %18 = vsyncpa [#allocation9], 0
    %19 = vsyncpa [#allocation12], 0
    %20 = vsyncpa [#allocation4], 0
    %21 = vsyncpa [#allocation15], 0
    // Predicated region
    $region2: #{tpu_custom_call.1} parent=1 // pred_check
      _
    $region3: #{tpu_custom_call.1} parent=1 // pred_check_branch
      %23 = sbr.rel (0) target = $region5
    $region4: #{tpu_custom_call.1} parent=1 // pred_region
      %s25 = ssub.s32 512, 512
      %26 = vsyncadd [#allocation3], %s25
      %s27 = sshll.u32 [#allocation2], 4
      %s28 = int_to_ptr.vmem [resolvable:$true] %s27
      %33 = dma.hbm_to_vmem [thread:$0]  %s0, 512, %s28, [#allocation3], 64, 64, 4
    $region5: #{tpu_custom_call.1} parent=1 // pred_fallthru
      _
    // Predicated region
    $region6: #{tpu_custom_call.1} parent=1 // pred_check
      _
    $region7: #{tpu_custom_call.1} parent=1 // pred_check_branch
      %35 = sbr.rel (0) target = $region9
    $region8: #{tpu_custom_call.1} parent=1 // pred_region
      %s37 = ssub.s32 128, 128
      %38 = vsyncadd [#allocation6], %s37
      %s40 = sshll.u32 [#allocation5], 4
      %s41 = int_to_ptr.vmem [resolvable:$true] %s40
      %43 = dma.hbm_to_vmem [thread:$0]  %s1, 128, %s41, [#allocation6]
    $region9: #{tpu_custom_call.1} parent=1 // pred_fallthru
      _
    // Predicated region
    $region10: #{tpu_custom_call.1} parent=1 // pred_check
      _
    $region11: #{tpu_custom_call.1} parent=1 // pred_check_branch
      %45 = sbr.rel (0) target = $region13
    $region12: #{tpu_custom_call.1} parent=1 // pred_region
      %s47 = ssub.s32 2048, 2048
      %48 = vsyncadd [#allocation6], %s47
      %s49 = sshll.u32 [#allocation7], 4
      %s50 = int_to_ptr.vmem [resolvable:$true] %s49
      %55 = dma.hbm_to_vmem [thread:$0]  %s2, 2048, %s50, [#allocation6], 64, 64, 4
    $region13: #{tpu_custom_call.1} parent=1 // pred_fallthru
      _
    // Predicated region
    $region14: #{tpu_custom_call.1} parent=1 // pred_check
      _
    $region15: #{tpu_custom_call.1} parent=1 // pred_check_branch
      %57 = sbr.rel (0) target = $region17
    $region16: #{tpu_custom_call.1} parent=1 // pred_region
      _
    $region17: #{tpu_custom_call.1} parent=1 // pred_fallthru
      _
    // Predicated region
    $region18: #{tpu_custom_call.1} parent=1 // pred_check
      _
    $region19: #{tpu_custom_call.1} parent=1 // pred_check_branch
      %59 = sbr.rel (0) target = $region21
    $region20: #{tpu_custom_call.1} parent=1 // pred_region
      %s61 = ssub.s32 4096, 4096
      %62 = vsyncadd [#allocation9], %s61
      %s63 = sshll.u32 [#allocation8], 4
      %s64 = int_to_ptr.vmem [resolvable:$true] %s63
      %69 = dma.hbm_to_vmem [thread:$0]  %s4, 4096, %s64, [#allocation9], 256, 256, 16
    $region21: #{tpu_custom_call.1} parent=1 // pred_fallthru
      _
    // Predicated region
    $region22: #{tpu_custom_call.1} parent=1 // pred_check
      _
    $region23: #{tpu_custom_call.1} parent=1 // pred_check_branch
      %71 = sbr.rel (0) target = $region25
    $region24: #{tpu_custom_call.1} parent=1 // pred_region
      _
    $region25: #{tpu_custom_call.1} parent=1 // pred_fallthru
      _
    // Predicated region
    $region26: #{tpu_custom_call.1} parent=1 // pred_check
      _
    $region27: #{tpu_custom_call.1} parent=1 // pred_check_branch
      %73 = sbr.rel (0) target = $region29
    $region28: #{tpu_custom_call.1} parent=1 // pred_region
      %s75 = ssub.s32 4096, 4096
      %76 = vsyncadd [#allocation9], %s75
      %s77 = sshll.u32 [#allocation10], 4
      %s78 = int_to_ptr.vmem [resolvable:$true] %s77
      %83 = dma.hbm_to_vmem [thread:$0]  %s6, 4096, %s78, [#allocation9], 256, 256, 16
    $region29: #{tpu_custom_call.1} parent=1 // pred_fallthru
      _
    // Predicated region
    $region30: #{tpu_custom_call.1} parent=1 // pred_check
      _
    $region31: #{tpu_custom_call.1} parent=1 // pred_check_branch
      %85 = sbr.rel (0) target = $region33
    $region32: #{tpu_custom_call.1} parent=1 // pred_region
      %s87 = ssub.s32 1024, 1024
      %88 = vsyncadd [#allocation12], %s87
      %s89 = sshll.u32 [#allocation11], 4
      %s90 = int_to_ptr.vmem [resolvable:$true] %s89
      %95 = dma.hbm_to_vmem [thread:$0]  %s7, 1024, %s90, [#allocation12], 64, 64, 4
    $region33: #{tpu_custom_call.1} parent=1 // pred_fallthru
      _
    // Predicated region
    $region34: #{tpu_custom_call.1} parent=1 // pred_check
      _
    $region35: #{tpu_custom_call.1} parent=1 // pred_check_branch
      %97 = sbr.rel (0) target = $region37
    $region36: #{tpu_custom_call.1} parent=1 // pred_region
      _
    $region37: #{tpu_custom_call.1} parent=1 // pred_fallthru
      _
    // Predicated region
    $region38: #{tpu_custom_call.1} parent=1 // pred_check
      _
    $region39: #{tpu_custom_call.1} parent=1 // pred_check_branch
      %99 = sbr.rel (0) target = $region41
    $region40: #{tpu_custom_call.1} parent=1 // pred_region
      %100 = dma.done [#allocation3], 512
    $region41: #{tpu_custom_call.1} parent=1 // pred_fallthru
      _
    // Predicated region
    $region42: #{tpu_custom_call.1} parent=1 // pred_check
      _
    $region43: #{tpu_custom_call.1} parent=1 // pred_check_branch
      %102 = sbr.rel (0) target = $region45
    $region44: #{tpu_custom_call.1} parent=1 // pred_region
      %103 = dma.done [#allocation6], 128
    $region45: #{tpu_custom_call.1} parent=1 // pred_fallthru
      _
    // Predicated region
    $region46: #{tpu_custom_call.1} parent=1 // pred_check
      _
    $region47: #{tpu_custom_call.1} parent=1 // pred_check_branch
      %105 = sbr.rel (0) target = $region49
    $region48: #{tpu_custom_call.1} parent=1 // pred_region
      %106 = dma.done [#allocation6], 2048
    $region49: #{tpu_custom_call.1} parent=1 // pred_fallthru
      _
    // Predicated region
    $region50: #{tpu_custom_call.1} parent=1 // pred_check
      _
    $region51: #{tpu_custom_call.1} parent=1 // pred_check_branch
      %108 = sbr.rel (0) target = $region53
    $region52: #{tpu_custom_call.1} parent=1 // pred_region
      %109 = dma.done [#allocation9], 4096
    $region53: #{tpu_custom_call.1} parent=1 // pred_fallthru
      _
    // Predicated region
    $region54: #{tpu_custom_call.1} parent=1 // pred_check
      _
    $region55: #{tpu_custom_call.1} parent=1 // pred_check_branch
      %111 = sbr.rel (0) target = $region57
    $region56: #{tpu_custom_call.1} parent=1 // pred_region
      %112 = dma.done [#allocation9], 4096
    $region57: #{tpu_custom_call.1} parent=1 // pred_fallthru
      _
    // Predicated region
    $region58: #{tpu_custom_call.1} parent=1 // pred_check
      _
    $region59: #{tpu_custom_call.1} parent=1 // pred_check_branch
      %114 = sbr.rel (0) target = $region61
    $region60: #{tpu_custom_call.1} parent=1 // pred_region
      %115 = dma.done [#allocation12], 1024
    $region61: #{tpu_custom_call.1} parent=1 // pred_fallthru
      _
    %v117 = vld [vmem:[#allocation2] sm:$0xf]
    %v118 = vld [vmem:[#allocation2 + $0x4] sm:$0xf]
    %v119 = vld [vmem:[#allocation2 + $0x8] sm:$0xf]
    %v120 = vld [vmem:[#allocation2 + $0xc] sm:$0xf]
    %v121 = vld [vmem:[#allocation2 + $0x10] sm:$0xf]
    %v122 = vld [vmem:[#allocation2 + $0x14] sm:$0xf]
    %v123 = vld [vmem:[#allocation2 + $0x18] sm:$0xf]
    %v124 = vld [vmem:[#allocation2 + $0x1c] sm:$0xf]
    %v125 = vld [vmem:[#allocation7] sm:$0xf]
    %v126 = vld [vmem:[#allocation7 + $0x4] sm:$0xf]
    %v127 = vld [vmem:[#allocation7 + $0x8] sm:$0xf]
    %v128 = vld [vmem:[#allocation7 + $0xc] sm:$0xf]
    %v129 = vld [vmem:[#allocation7 + $0x10] sm:$0xf]
    %v130 = vld [vmem:[#allocation7 + $0x14] sm:$0xf]
    %v131 = vld [vmem:[#allocation7 + $0x18] sm:$0xf]
    %v132 = vld [vmem:[#allocation7 + $0x1c] sm:$0xf]
    %v133 = vld [vmem:[#allocation7 + $0x20] sm:$0xf]
    %v134 = vld [vmem:[#allocation7 + $0x24] sm:$0xf]
    %v135 = vld [vmem:[#allocation7 + $0x28] sm:$0xf]
    %v136 = vld [vmem:[#allocation7 + $0x2c] sm:$0xf]
    %v137 = vld [vmem:[#allocation7 + $0x30] sm:$0xf]
    %v138 = vld [vmem:[#allocation7 + $0x34] sm:$0xf]
    %v139 = vld [vmem:[#allocation7 + $0x38] sm:$0xf]
    %v140 = vld [vmem:[#allocation7 + $0x3c] sm:$0xf]
    %v141 = vld [vmem:[%s3] sm:$0x1]
    %v143 = vlaneseq
    %v144 = vshrl.u32 %v143, 7
    %v145 = vsub.s32 0, %v144
    %v146 = vrot.slane %v141, %v145
    %v156 = vunpack.c.l.b16 %v117
    %v157 = vunpack.c.l.b16 %v118
    %v158 = vunpack.c.l.b16 %v119
    %v159 = vunpack.c.l.b16 %v120
    %v160 = vunpack.c.l.b16 %v121
    %v161 = vunpack.c.l.b16 %v122
    %v162 = vunpack.c.l.b16 %v123
    %v163 = vunpack.c.l.b16 %v124
    %v164 = vpack.c.b16 %v157, %v156
    %v165 = vpack.c.b16 %v159, %v158
    %v166 = vpack.c.b16 %v161, %v160
    %v167 = vpack.c.b16 %v163, %v162
    %v188 = vunpack.c.l.b16 %v125
    %v189 = vunpack.c.l.b16 %v126
    %v190 = vunpack.c.l.b16 %v127
    %v191 = vunpack.c.l.b16 %v128
    %v192 = vunpack.c.l.b16 %v129
    %v193 = vunpack.c.l.b16 %v130
    %v194 = vunpack.c.l.b16 %v131
    %v195 = vunpack.c.l.b16 %v132
    %v196 = vunpack.c.l.b16 %v133
    %v197 = vunpack.c.l.b16 %v134
    %v198 = vunpack.c.l.b16 %v135
    %v199 = vunpack.c.l.b16 %v136
    %v200 = vunpack.c.l.b16 %v137
    %v201 = vunpack.c.l.b16 %v138
    %v202 = vunpack.c.l.b16 %v139
    %v203 = vunpack.c.l.b16 %v140
    %v204 = vpack.c.b16 %v189, %v188
    %v205 = vpack.c.b16 %v191, %v190
    %v206 = vpack.c.b16 %v193, %v192
    %v207 = vpack.c.b16 %v195, %v194
    %v208 = vpack.c.b16 %v197, %v196
    %v209 = vpack.c.b16 %v199, %v198
    %v210 = vpack.c.b16 %v201, %v200
    %v211 = vpack.c.b16 %v203, %v202
    %220 = vmatprep.subr.bf16.mxu0 0
    %221 = vmatpush1.bf16.msra.mxu0 %v204
    %222 = vmatprep.subr.bf16.mxu0 0
    %223 = vmatpush1.bf16.msra.mxu0 %v205
    %224 = vmatprep.subr.bf16.mxu0 0
    %225 = vmatpush1.bf16.msra.mxu0 %v206
    %226 = vmatprep.subr.bf16.mxu0 0
    %227 = vmatpush1.bf16.msra.mxu0 %v207
    %228 = vmatprep.subr.bf16.mxu0 0
    %229 = vmatpush1.bf16.msra.mxu0 %v208
    %230 = vmatprep.subr.bf16.mxu0 0
    %231 = vmatpush1.bf16.msra.mxu0 %v209
    %232 = vmatprep.subr.bf16.mxu0 0
    %233 = vmatpush1.bf16.msra.mxu0 %v210
    %234 = vmatprep.subr.bf16.mxu0 0
    %235 = vmatpush1.bf16.msra.mxu0 %v211
    %236 = vmatprep.subr.bf16.mxu0 0
    %237 = vmatpush1.bf16.msra.mxu0 0
    %238 = vmatprep.subr.bf16.mxu0 0
    %239 = vmatpush1.bf16.msra.mxu0 0
    %240 = vmatprep.subr.bf16.mxu0 0
    %241 = vmatpush1.bf16.msra.mxu0 0
    %242 = vmatprep.subr.bf16.mxu0 0
    %243 = vmatpush1.bf16.msra.mxu0 0
    %244 = vmatprep.subr.bf16.mxu0 0
    %245 = vmatpush1.bf16.msra.mxu0 0
    %246 = vmatprep.subr.bf16.mxu0 0
    %247 = vmatpush1.bf16.msra.mxu0 0
    %248 = vmatprep.subr.bf16.mxu0 0
    %249 = vmatpush1.bf16.msra.mxu0 0
    %250 = vmatprep.subr.bf16.mxu0 0
    %251 = vmatpush1.bf16.msra.mxu0 0
    %252 = vmatprep.mubr.bf16.mxu0 0
    %253 = vmatmul.mubr.bf16.gmra.mrb[0].mxu0 %v164
    %v254 = vpop.f32.mrb[0].mxu0
    %v255 = vadd.f32 %v146, %v254
    %v256 = vpop.f32.mrb[0].mxu0
    %v257 = vpop.f32.mrb[0].mxu0
    %v258 = vadd.f32 %v146, %v257
    %v259 = vpop.f32.mrb[0].mxu0
    %260 = vmatprep.mubr.bf16.mxu0 0
    %261 = vmatmul.mubr.bf16.gmra.mrb[0].mxu0 %v165
    %v262 = vpop.f32.mrb[0].mxu0
    %v263 = vadd.f32 %v146, %v262
    %v264 = vpop.f32.mrb[0].mxu0
    %v265 = vpop.f32.mrb[0].mxu0
    %v266 = vadd.f32 %v146, %v265
    %v267 = vpop.f32.mrb[0].mxu0
    %268 = vmatprep.mubr.bf16.mxu0 0
    %269 = vmatmul.mubr.bf16.gmra.mrb[0].mxu0 %v166
    %v270 = vpop.f32.mrb[0].mxu0
    %v271 = vadd.f32 %v146, %v270
    %v272 = vpop.f32.mrb[0].mxu0
    %v273 = vpop.f32.mrb[0].mxu0
    %v274 = vadd.f32 %v146, %v273
    %v275 = vpop.f32.mrb[0].mxu0
    %276 = vmatprep.mubr.bf16.mxu0 0
    %277 = vmatmul.mubr.bf16.gmra.mrb[0].mxu0 %v167
    %v278 = vpop.f32.mrb[0].mxu0
    %v279 = vadd.f32 %v146, %v278
    %v280 = vpop.f32.mrb[0].mxu0
    %v281 = vpop.f32.mrb[0].mxu0
    %v282 = vadd.f32 %v146, %v281
    %v283 = vpop.f32.mrb[0].mxu0
    %284 = vdwg.mxu0
    %v285 = vmax.f32 %v255, 0.0
    %v286 = vmax.f32 %v258, 0.0
    %v287 = vmax.f32 %v263, 0.0
    %v288 = vmax.f32 %v266, 0.0
    %v289 = vmax.f32 %v271, 0.0
    %v290 = vmax.f32 %v274, 0.0
    %v291 = vmax.f32 %v279, 0.0
    %v292 = vmax.f32 %v282, 0.0
    %s293 = scalar_lea.vmem [#allocation7], 64
    %v294 = vld [vmem:[%s293] sm:$0xf]
    %v295 = vld [vmem:[%s293 + $0x4] sm:$0xf]
    %v296 = vld [vmem:[%s293 + $0x8] sm:$0xf]
    %v297 = vld [vmem:[%s293 + $0xc] sm:$0xf]
    %v298 = vld [vmem:[%s293 + $0x10] sm:$0xf]
    %v299 = vld [vmem:[%s293 + $0x14] sm:$0xf]
    %v300 = vld [vmem:[%s293 + $0x18] sm:$0xf]
    %v301 = vld [vmem:[%s293 + $0x1c] sm:$0xf]
    %v302 = vld [vmem:[%s293 + $0x20] sm:$0xf]
    %v303 = vld [vmem:[%s293 + $0x24] sm:$0xf]
    %v304 = vld [vmem:[%s293 + $0x28] sm:$0xf]
    %v305 = vld [vmem:[%s293 + $0x2c] sm:$0xf]
    %v306 = vld [vmem:[%s293 + $0x30] sm:$0xf]
    %v307 = vld [vmem:[%s293 + $0x34] sm:$0xf]
    %v308 = vld [vmem:[%s293 + $0x38] sm:$0xf]
    %v309 = vld [vmem:[%s293 + $0x3c] sm:$0xf]
    %v310 = vpack.c.bf16 %v286, %v285
    %v311 = vpack.c.bf16 %v288, %v287
    %v312 = vpack.c.bf16 %v290, %v289
    %v313 = vpack.c.bf16 %v292, %v291
    %s314 = scalar_lea.vmem %s3, 1
    %v315 = vld [vmem:[%s314] sm:$0x1]
    %v317 = vlaneseq
    %v318 = vshrl.u32 %v317, 7
    %v319 = vsub.s32 0, %v318
    %v320 = vrot.slane %v315, %v319
    %v338 = vunpack.c.l.b16 %v294
    %v339 = vunpack.c.l.b16 %v295
    %v340 = vunpack.c.l.b16 %v296
    %v341 = vunpack.c.l.b16 %v297
    %v342 = vunpack.c.l.b16 %v298
    %v343 = vunpack.c.l.b16 %v299
    %v344 = vunpack.c.l.b16 %v300
    %v345 = vunpack.c.l.b16 %v301
    %v346 = vunpack.c.l.b16 %v302
    %v347 = vunpack.c.l.b16 %v303
    %v348 = vunpack.c.l.b16 %v304
    %v349 = vunpack.c.l.b16 %v305
    %v350 = vunpack.c.l.b16 %v306
    %v351 = vunpack.c.l.b16 %v307
    %v352 = vunpack.c.l.b16 %v308
    %v353 = vunpack.c.l.b16 %v309
    %v354 = vpack.c.b16 %v339, %v338
    %v355 = vpack.c.b16 %v341, %v340
    %v356 = vpack.c.b16 %v343, %v342
    %v357 = vpack.c.b16 %v345, %v344
    %v358 = vpack.c.b16 %v347, %v346
    %v359 = vpack.c.b16 %v349, %v348
    %v360 = vpack.c.b16 %v351, %v350
    %v361 = vpack.c.b16 %v353, %v352
    %370 = vmatprep.subr.bf16.mxu0 0
    %371 = vmatpush1.bf16.msra.mxu0 %v354
    %372 = vmatprep.subr.bf16.mxu0 0
    %373 = vmatpush1.bf16.msra.mxu0 %v355
    %374 = vmatprep.subr.bf16.mxu0 0
    %375 = vmatpush1.bf16.msra.mxu0 %v356
    %376 = vmatprep.subr.bf16.mxu0 0
    %377 = vmatpush1.bf16.msra.mxu0 %v357
    %378 = vmatprep.subr.bf16.mxu0 0
    %379 = vmatpush1.bf16.msra.mxu0 %v358
    %380 = vmatprep.subr.bf16.mxu0 0
    %381 = vmatpush1.bf16.msra.mxu0 %v359
    %382 = vmatprep.subr.bf16.mxu0 0
    %383 = vmatpush1.bf16.msra.mxu0 %v360
    %384 = vmatprep.subr.bf16.mxu0 0
    %385 = vmatpush1.bf16.msra.mxu0 %v361
    %386 = vmatprep.subr.bf16.mxu0 0
    %387 = vmatpush1.bf16.msra.mxu0 0
    %388 = vmatprep.subr.bf16.mxu0 0
    %389 = vmatpush1.bf16.msra.mxu0 0
    %390 = vmatprep.subr.bf16.mxu0 0
    %391 = vmatpush1.bf16.msra.mxu0 0
    %392 = vmatprep.subr.bf16.mxu0 0
    %393 = vmatpush1.bf16.msra.mxu0 0
    %394 = vmatprep.subr.bf16.mxu0 0
    %395 = vmatpush1.bf16.msra.mxu0 0
    %396 = vmatprep.subr.bf16.mxu0 0
    %397 = vmatpush1.bf16.msra.mxu0 0
    %398 = vmatprep.subr.bf16.mxu0 0
    %399 = vmatpush1.bf16.msra.mxu0 0
    %400 = vmatprep.subr.bf16.mxu0 0
    %401 = vmatpush1.bf16.msra.mxu0 0
    %402 = vmatprep.mubr.bf16.mxu0 0
    %403 = vmatmul.mubr.bf16.gmra.mrb[0].mxu0 %v310
    %v404 = vpop.f32.mrb[0].mxu0
    %v405 = vadd.f32 %v320, %v404
    %v406 = vpop.f32.mrb[0].mxu0
    %v407 = vpop.f32.mrb[0].mxu0
    %v408 = vadd.f32 %v320, %v407
    %v409 = vpop.f32.mrb[0].mxu0
    %410 = vmatprep.mubr.bf16.mxu0 0
    %411 = vmatmul.mubr.bf16.gmra.mrb[0].mxu0 %v311
    %v412 = vpop.f32.mrb[0].mxu0
    %v413 = vadd.f32 %v320, %v412
    %v414 = vpop.f32.mrb[0].mxu0
    %v415 = vpop.f32.mrb[0].mxu0
    %v416 = vadd.f32 %v320, %v415
    %v417 = vpop.f32.mrb[0].mxu0
    %418 = vmatprep.mubr.bf16.mxu0 0
    %419 = vmatmul.mubr.bf16.gmra.mrb[0].mxu0 %v312
    %v420 = vpop.f32.mrb[0].mxu0
    %v421 = vadd.f32 %v320, %v420
    %v422 = vpop.f32.mrb[0].mxu0
    %v423 = vpop.f32.mrb[0].mxu0
    %v424 = vadd.f32 %v320, %v423
    %v425 = vpop.f32.mrb[0].mxu0
    %426 = vmatprep.mubr.bf16.mxu0 0
    %427 = vmatmul.mubr.bf16.gmra.mrb[0].mxu0 %v313
    %v428 = vpop.f32.mrb[0].mxu0
    %v429 = vadd.f32 %v320, %v428
    %v430 = vpop.f32.mrb[0].mxu0
    %v431 = vpop.f32.mrb[0].mxu0
    %v432 = vadd.f32 %v320, %v431
    %v433 = vpop.f32.mrb[0].mxu0
    %434 = vdwg.mxu0
    %v435 = vmax.f32 %v405, 0.0
    %v436 = vmax.f32 %v408, 0.0
    %v437 = vmax.f32 %v413, 0.0
    %v438 = vmax.f32 %v416, 0.0
    %v439 = vmax.f32 %v421, 0.0
    %v440 = vmax.f32 %v424, 0.0
    %v441 = vmax.f32 %v429, 0.0
    %v442 = vmax.f32 %v432, 0.0
    %v443 = vld [vmem:[#allocation8] sm:$0xff]
    %v444 = vld [vmem:[#allocation8 + $0x8] sm:$0xff]
    %v445 = vld [vmem:[#allocation8 + $0x10] sm:$0xff]
    %v446 = vld [vmem:[#allocation8 + $0x18] sm:$0xff]
    %v447 = vld [vmem:[#allocation8 + $0x20] sm:$0xff]
    %v448 = vld [vmem:[#allocation8 + $0x28] sm:$0xff]
    %v449 = vld [vmem:[#allocation8 + $0x30] sm:$0xff]
    %v450 = vld [vmem:[#allocation8 + $0x38] sm:$0xff]
    %v451 = vld [vmem:[#allocation8 + $0x40] sm:$0xff]
    %v452 = vld [vmem:[#allocation8 + $0x48] sm:$0xff]
    %v453 = vld [vmem:[#allocation8 + $0x50] sm:$0xff]
    %v454 = vld [vmem:[#allocation8 + $0x58] sm:$0xff]
    %v455 = vld [vmem:[#allocation8 + $0x60] sm:$0xff]
    %v456 = vld [vmem:[#allocation8 + $0x68] sm:$0xff]
    %v457 = vld [vmem:[#allocation8 + $0x70] sm:$0xff]
    %v458 = vld [vmem:[#allocation8 + $0x78] sm:$0xff]
    %v459 = vld [vmem:[#allocation8 + $0x80] sm:$0xff]
    %v460 = vld [vmem:[#allocation8 + $0x88] sm:$0xff]
    %v461 = vld [vmem:[#allocation8 + $0x90] sm:$0xff]
    %v462 = vld [vmem:[#allocation8 + $0x98] sm:$0xff]
    %v463 = vld [vmem:[#allocation8 + $0xa0] sm:$0xff]
    %v464 = vld [vmem:[#allocation8 + $0xa8] sm:$0xff]
    %v465 = vld [vmem:[#allocation8 + $0xb0] sm:$0xff]
    %v466 = vld [vmem:[#allocation8 + $0xb8] sm:$0xff]
    %v467 = vld [vmem:[#allocation8 + $0xc0] sm:$0xff]
    %v468 = vld [vmem:[#allocation8 + $0xc8] sm:$0xff]
    %v469 = vld [vmem:[#allocation8 + $0xd0] sm:$0xff]
    %v470 = vld [vmem:[#allocation8 + $0xd8] sm:$0xff]
    %v471 = vld [vmem:[#allocation8 + $0xe0] sm:$0xff]
    %v472 = vld [vmem:[#allocation8 + $0xe8] sm:$0xff]
    %v473 = vld [vmem:[#allocation8 + $0xf0] sm:$0xff]
    %v474 = vld [vmem:[#allocation8 + $0xf8] sm:$0xff]
    %v475 = vpack.c.bf16 %v436, %v435
    %v476 = vpack.c.bf16 %v438, %v437
    %v477 = vpack.c.bf16 %v440, %v439
    %v478 = vpack.c.bf16 %v442, %v441
    %v479 = vld [vmem:[%s5] sm:$0xf]
    %v481 = vlaneseq
    %v482 = vshrl.u32 %v481, 7
    %v483 = vsub.s32 0, %v482
    %v484 = vrot.slane %v479, %v483
    %v485 = vlaneseq
    %v486 = vshrl.u32 %v485, 7
    %v487 = vsub.s32 1, %v486
    %v488 = vrot.slane %v479, %v487
    %v489 = vlaneseq
    %v490 = vshrl.u32 %v489, 7
    %v491 = vsub.s32 2, %v490
    %v492 = vrot.slane %v479, %v491
    %v493 = vlaneseq
    %v494 = vshrl.u32 %v493, 7
    %v495 = vsub.s32 3, %v494
    %v496 = vrot.slane %v479, %v495
    %v533 = vunpack.c.l.b16 %v443
    %v534 = vunpack.c.h.b16 %v443
    %v535 = vunpack.c.l.b16 %v444
    %v536 = vunpack.c.h.b16 %v444
    %v537 = vunpack.c.l.b16 %v445
    %v538 = vunpack.c.h.b16 %v445
    %v539 = vunpack.c.l.b16 %v446
    %v540 = vunpack.c.h.b16 %v446
    %v541 = vunpack.c.l.b16 %v447
    %v542 = vunpack.c.h.b16 %v447
    %v543 = vunpack.c.l.b16 %v448
    %v544 = vunpack.c.h.b16 %v448
    %v545 = vunpack.c.l.b16 %v449
    %v546 = vunpack.c.h.b16 %v449
    %v547 = vunpack.c.l.b16 %v450
    %v548 = vunpack.c.h.b16 %v450
    %v549 = vunpack.c.l.b16 %v451
    %v550 = vunpack.c.h.b16 %v451
    %v551 = vunpack.c.l.b16 %v452
    %v552 = vunpack.c.h.b16 %v452
    %v553 = vunpack.c.l.b16 %v453
    %v554 = vunpack.c.h.b16 %v453
    %v555 = vunpack.c.l.b16 %v454
    %v556 = vunpack.c.h.b16 %v454
    %v557 = vunpack.c.l.b16 %v455
    %v558 = vunpack.c.h.b16 %v455
    %v559 = vunpack.c.l.b16 %v456
    %v560 = vunpack.c.h.b16 %v456
    %v561 = vunpack.c.l.b16 %v457
    %v562 = vunpack.c.h.b16 %v457
    %v563 = vunpack.c.l.b16 %v458
    %v564 = vunpack.c.h.b16 %v458
    %v565 = vunpack.c.l.b16 %v459
    %v566 = vunpack.c.h.b16 %v459
    %v567 = vunpack.c.l.b16 %v460
    %v568 = vunpack.c.h.b16 %v460
    %v569 = vunpack.c.l.b16 %v461
    %v570 = vunpack.c.h.b16 %v461
    %v571 = vunpack.c.l.b16 %v462
    %v572 = vunpack.c.h.b16 %v462
    %v573 = vunpack.c.l.b16 %v463
    %v574 = vunpack.c.h.b16 %v463
    %v575 = vunpack.c.l.b16 %v464
    %v576 = vunpack.c.h.b16 %v464
    %v577 = vunpack.c.l.b16 %v465
    %v578 = vunpack.c.h.b16 %v465
    %v579 = vunpack.c.l.b16 %v466
    %v580 = vunpack.c.h.b16 %v466
    %v581 = vunpack.c.l.b16 %v467
    %v582 = vunpack.c.h.b16 %v467
    %v583 = vunpack.c.l.b16 %v468
    %v584 = vunpack.c.h.b16 %v468
    %v585 = vunpack.c.l.b16 %v469
    %v586 = vunpack.c.h.b16 %v469
    %v587 = vunpack.c.l.b16 %v470
    %v588 = vunpack.c.h.b16 %v470
    %v589 = vunpack.c.l.b16 %v471
    %v590 = vunpack.c.h.b16 %v471
    %v591 = vunpack.c.l.b16 %v472
    %v592 = vunpack.c.h.b16 %v472
    %v593 = vunpack.c.l.b16 %v473
    %v594 = vunpack.c.h.b16 %v473
    %v595 = vunpack.c.l.b16 %v474
    %v596 = vunpack.c.h.b16 %v474
    %v597 = vpack.c.b16 %v537, %v533
    %v598 = vpack.c.b16 %v538, %v534
    %v599 = vpack.c.b16 %v539, %v535
    %v600 = vpack.c.b16 %v540, %v536
    %v601 = vpack.c.b16 %v545, %v541
    %v602 = vpack.c.b16 %v546, %v542
    %v603 = vpack.c.b16 %v547, %v543
    %v604 = vpack.c.b16 %v548, %v544
    %v605 = vpack.c.b16 %v553, %v549
    %v606 = vpack.c.b16 %v554, %v550
    %v607 = vpack.c.b16 %v555, %v551
    %v608 = vpack.c.b16 %v556, %v552
    %v609 = vpack.c.b16 %v561, %v557
    %v610 = vpack.c.b16 %v562, %v558
    %v611 = vpack.c.b16 %v563, %v559
    %v612 = vpack.c.b16 %v564, %v560
    %v613 = vpack.c.b16 %v569, %v565
    %v614 = vpack.c.b16 %v570, %v566
    %v615 = vpack.c.b16 %v571, %v567
    %v616 = vpack.c.b16 %v572, %v568
    %v617 = vpack.c.b16 %v577, %v573
    %v618 = vpack.c.b16 %v578, %v574
    %v619 = vpack.c.b16 %v579, %v575
    %v620 = vpack.c.b16 %v580, %v576
    %v621 = vpack.c.b16 %v585, %v581
    %v622 = vpack.c.b16 %v586, %v582
    %v623 = vpack.c.b16 %v587, %v583
    %v624 = vpack.c.b16 %v588, %v584
    %v625 = vpack.c.b16 %v593, %v589
    %v626 = vpack.c.b16 %v594, %v590
    %v627 = vpack.c.b16 %v595, %v591
    %v628 = vpack.c.b16 %v596, %v592
    %661 = vmatprep.subr.bf16.mxu0 %v598
    %662 = vmatpush1.bf16.msra.mxu0 %v597
    %663 = vmatprep.subr.bf16.mxu0 %v602
    %664 = vmatpush1.bf16.msra.mxu0 %v601
    %665 = vmatprep.subr.bf16.mxu0 %v606
    %666 = vmatpush1.bf16.msra.mxu0 %v605
    %667 = vmatprep.subr.bf16.mxu0 %v610
    %668 = vmatpush1.bf16.msra.mxu0 %v609
    %669 = vmatprep.subr.bf16.mxu0 %v614
    %670 = vmatpush1.bf16.msra.mxu0 %v613
    %671 = vmatprep.subr.bf16.mxu0 %v618
    %672 = vmatpush1.bf16.msra.mxu0 %v617
    %673 = vmatprep.subr.bf16.mxu0 %v622
    %674 = vmatpush1.bf16.msra.mxu0 %v621
    %675 = vmatprep.subr.bf16.mxu0 %v626
    %676 = vmatpush1.bf16.msra.mxu0 %v625
    %677 = vmatprep.subr.bf16.mxu0 0
    %678 = vmatpush1.bf16.msra.mxu0 0
    %679 = vmatprep.subr.bf16.mxu0 0
    %680 = vmatpush1.bf16.msra.mxu0 0
    %681 = vmatprep.subr.bf16.mxu0 0
    %682 = vmatpush1.bf16.msra.mxu0 0
    %683 = vmatprep.subr.bf16.mxu0 0
    %684 = vmatpush1.bf16.msra.mxu0 0
    %685 = vmatprep.subr.bf16.mxu0 0
    %686 = vmatpush1.bf16.msra.mxu0 0
    %687 = vmatprep.subr.bf16.mxu0 0
    %688 = vmatpush1.bf16.msra.mxu0 0
    %689 = vmatprep.subr.bf16.mxu0 0
    %690 = vmatpush1.bf16.msra.mxu0 0
    %691 = vmatprep.subr.bf16.mxu0 0
    %692 = vmatpush1.bf16.msra.mxu0 0
    %693 = vmatprep.mubr.bf16.mxu0 0
    %694 = vmatmul.mubr.bf16.gmra.mrb[0].mxu0 %v475
    %v695 = vpop.f32.mrb[0].mxu0
    %v696 = vadd.f32 %v484, %v695
    %v697 = vpop.f32.mrb[0].mxu0
    %v698 = vadd.f32 %v488, %v697
    %v699 = vpop.f32.mrb[0].mxu0
    %v700 = vadd.f32 %v484, %v699
    %v701 = vpop.f32.mrb[0].mxu0
    %v702 = vadd.f32 %v488, %v701
    %703 = vmatprep.mubr.bf16.mxu0 0
    %704 = vmatmul.mubr.bf16.gmra.mrb[0].mxu0 %v476
    %v705 = vpop.f32.mrb[0].mxu0
    %v706 = vadd.f32 %v484, %v705
    %v707 = vpop.f32.mrb[0].mxu0
    %v708 = vadd.f32 %v488, %v707
    %v709 = vpop.f32.mrb[0].mxu0
    %v710 = vadd.f32 %v484, %v709
    %v711 = vpop.f32.mrb[0].mxu0
    %v712 = vadd.f32 %v488, %v711
    %713 = vmatprep.mubr.bf16.mxu0 0
    %714 = vmatmul.mubr.bf16.gmra.mrb[0].mxu0 %v477
    %v715 = vpop.f32.mrb[0].mxu0
    %v716 = vadd.f32 %v484, %v715
    %v717 = vpop.f32.mrb[0].mxu0
    %v718 = vadd.f32 %v488, %v717
    %v719 = vpop.f32.mrb[0].mxu0
    %v720 = vadd.f32 %v484, %v719
    %v721 = vpop.f32.mrb[0].mxu0
    %v722 = vadd.f32 %v488, %v721
    %723 = vmatprep.mubr.bf16.mxu0 0
    %724 = vmatmul.mubr.bf16.gmra.mrb[0].mxu0 %v478
    %v725 = vpop.f32.mrb[0].mxu0
    %v726 = vadd.f32 %v484, %v725
    %v727 = vpop.f32.mrb[0].mxu0
    %v728 = vadd.f32 %v488, %v727
    %v729 = vpop.f32.mrb[0].mxu0
    %v730 = vadd.f32 %v484, %v729
    %v731 = vpop.f32.mrb[0].mxu0
    %v732 = vadd.f32 %v488, %v731
    %733 = vdwg.mxu0
    %734 = vmatprep.subr.bf16.mxu0 %v600
    %735 = vmatpush1.bf16.msra.mxu0 %v599
    %736 = vmatprep.subr.bf16.mxu0 %v604
    %737 = vmatpush1.bf16.msra.mxu0 %v603
    %738 = vmatprep.subr.bf16.mxu0 %v608
    %739 = vmatpush1.bf16.msra.mxu0 %v607
    %740 = vmatprep.subr.bf16.mxu0 %v612
    %741 = vmatpush1.bf16.msra.mxu0 %v611
    %742 = vmatprep.subr.bf16.mxu0 %v616
    %743 = vmatpush1.bf16.msra.mxu0 %v615
    %744 = vmatprep.subr.bf16.mxu0 %v620
    %745 = vmatpush1.bf16.msra.mxu0 %v619
    %746 = vmatprep.subr.bf16.mxu0 %v624
    %747 = vmatpush1.bf16.msra.mxu0 %v623
    %748 = vmatprep.subr.bf16.mxu0 %v628
    %749 = vmatpush1.bf16.msra.mxu0 %v627
    %750 = vmatprep.subr.bf16.mxu0 0
    %751 = vmatpush1.bf16.msra.mxu0 0
    %752 = vmatprep.subr.bf16.mxu0 0
    %753 = vmatpush1.bf16.msra.mxu0 0
    %754 = vmatprep.subr.bf16.mxu0 0
    %755 = vmatpush1.bf16.msra.mxu0 0
    %756 = vmatprep.subr.bf16.mxu0 0
    %757 = vmatpush1.bf16.msra.mxu0 0
    %758 = vmatprep.subr.bf16.mxu0 0
    %759 = vmatpush1.bf16.msra.mxu0 0
    %760 = vmatprep.subr.bf16.mxu0 0
    %761 = vmatpush1.bf16.msra.mxu0 0
    %762 = vmatprep.subr.bf16.mxu0 0
    %763 = vmatpush1.bf16.msra.mxu0 0
    %764 = vmatprep.subr.bf16.mxu0 0
    %765 = vmatpush1.bf16.msra.mxu0 0
    %766 = vmatprep.mubr.bf16.mxu0 0
    %767 = vmatmul.mubr.bf16.gmra.mrb[0].mxu0 %v475
    %v768 = vpop.f32.mrb[0].mxu0
    %v769 = vadd.f32 %v492, %v768
    %v770 = vpop.f32.mrb[0].mxu0
    %v771 = vadd.f32 %v496, %v770
    %v772 = vpop.f32.mrb[0].mxu0
    %v773 = vadd.f32 %v492, %v772
    %v774 = vpop.f32.mrb[0].mxu0
    %v775 = vadd.f32 %v496, %v774
    %776 = vmatprep.mubr.bf16.mxu0 0
    %777 = vmatmul.mubr.bf16.gmra.mrb[0].mxu0 %v476
    %v778 = vpop.f32.mrb[0].mxu0
    %v779 = vadd.f32 %v492, %v778
    %v780 = vpop.f32.mrb[0].mxu0
    %v781 = vadd.f32 %v496, %v780
    %v782 = vpop.f32.mrb[0].mxu0
    %v783 = vadd.f32 %v492, %v782
    %v784 = vpop.f32.mrb[0].mxu0
    %v785 = vadd.f32 %v496, %v784
    %786 = vmatprep.mubr.bf16.mxu0 0
    %787 = vmatmul.mubr.bf16.gmra.mrb[0].mxu0 %v477
    %v788 = vpop.f32.mrb[0].mxu0
    %v789 = vadd.f32 %v492, %v788
    %v790 = vpop.f32.mrb[0].mxu0
    %v791 = vadd.f32 %v496, %v790
    %v792 = vpop.f32.mrb[0].mxu0
    %v793 = vadd.f32 %v492, %v792
    %v794 = vpop.f32.mrb[0].mxu0
    %v795 = vadd.f32 %v496, %v794
    %796 = vmatprep.mubr.bf16.mxu0 0
    %797 = vmatmul.mubr.bf16.gmra.mrb[0].mxu0 %v478
    %v798 = vpop.f32.mrb[0].mxu0
    %v799 = vadd.f32 %v492, %v798
    %v800 = vpop.f32.mrb[0].mxu0
    %v801 = vadd.f32 %v496, %v800
    %v802 = vpop.f32.mrb[0].mxu0
    %v803 = vadd.f32 %v492, %v802
    %v804 = vpop.f32.mrb[0].mxu0
    %v805 = vadd.f32 %v496, %v804
    %806 = vdwg.mxu0
    %v807 = vld [vmem:[#allocation10] sm:$0xff]
    %v808 = vld [vmem:[#allocation10 + $0x8] sm:$0xff]
    %v809 = vld [vmem:[#allocation10 + $0x10] sm:$0xff]
    %v810 = vld [vmem:[#allocation10 + $0x18] sm:$0xff]
    %v811 = vld [vmem:[#allocation10 + $0x20] sm:$0xff]
    %v812 = vld [vmem:[#allocation10 + $0x28] sm:$0xff]
    %v813 = vld [vmem:[#allocation10 + $0x30] sm:$0xff]
    %v814 = vld [vmem:[#allocation10 + $0x38] sm:$0xff]
    %v815 = vld [vmem:[#allocation10 + $0x40] sm:$0xff]
    %v816 = vld [vmem:[#allocation10 + $0x48] sm:$0xff]
    %v817 = vld [vmem:[#allocation10 + $0x50] sm:$0xff]
    %v818 = vld [vmem:[#allocation10 + $0x58] sm:$0xff]
    %v819 = vld [vmem:[#allocation10 + $0x60] sm:$0xff]
    %v820 = vld [vmem:[#allocation10 + $0x68] sm:$0xff]
    %v821 = vld [vmem:[#allocation10 + $0x70] sm:$0xff]
    %v822 = vld [vmem:[#allocation10 + $0x78] sm:$0xff]
    %v823 = vld [vmem:[#allocation10 + $0x80] sm:$0xff]
    %v824 = vld [vmem:[#allocation10 + $0x88] sm:$0xff]
    %v825 = vld [vmem:[#allocation10 + $0x90] sm:$0xff]
    %v826 = vld [vmem:[#allocation10 + $0x98] sm:$0xff]
    %v827 = vld [vmem:[#allocation10 + $0xa0] sm:$0xff]
    %v828 = vld [vmem:[#allocation10 + $0xa8] sm:$0xff]
    %v829 = vld [vmem:[#allocation10 + $0xb0] sm:$0xff]
    %v830 = vld [vmem:[#allocation10 + $0xb8] sm:$0xff]
    %v831 = vld [vmem:[#allocation10 + $0xc0] sm:$0xff]
    %v832 = vld [vmem:[#allocation10 + $0xc8] sm:$0xff]
    %v833 = vld [vmem:[#allocation10 + $0xd0] sm:$0xff]
    %v834 = vld [vmem:[#allocation10 + $0xd8] sm:$0xff]
    %v835 = vld [vmem:[#allocation10 + $0xe0] sm:$0xff]
    %v836 = vld [vmem:[#allocation10 + $0xe8] sm:$0xff]
    %v837 = vld [vmem:[#allocation10 + $0xf0] sm:$0xff]
    %v838 = vld [vmem:[#allocation10 + $0xf8] sm:$0xff]
    %v839 = vld [vmem:[#allocation5] sm:$0xff]
    %v872 = vunpack.c.l.b16 %v807
    %v873 = vunpack.c.h.b16 %v807
    %v874 = vunpack.c.l.b16 %v808
    %v875 = vunpack.c.h.b16 %v808
    %v876 = vunpack.c.l.b16 %v809
    %v877 = vunpack.c.h.b16 %v809
    %v878 = vunpack.c.l.b16 %v810
    %v879 = vunpack.c.h.b16 %v810
    %v880 = vunpack.c.l.b16 %v811
    %v881 = vunpack.c.h.b16 %v811
    %v882 = vunpack.c.l.b16 %v812
    %v883 = vunpack.c.h.b16 %v812
    %v884 = vunpack.c.l.b16 %v813
    %v885 = vunpack.c.h.b16 %v813
    %v886 = vunpack.c.l.b16 %v814
    %v887 = vunpack.c.h.b16 %v814
    %v888 = vunpack.c.l.b16 %v815
    %v889 = vunpack.c.h.b16 %v815
    %v890 = vunpack.c.l.b16 %v816
    %v891 = vunpack.c.h.b16 %v816
    %v892 = vunpack.c.l.b16 %v817
    %v893 = vunpack.c.h.b16 %v817
    %v894 = vunpack.c.l.b16 %v818
    %v895 = vunpack.c.h.b16 %v818
    %v896 = vunpack.c.l.b16 %v819
    %v897 = vunpack.c.h.b16 %v819
    %v898 = vunpack.c.l.b16 %v820
    %v899 = vunpack.c.h.b16 %v820
    %v900 = vunpack.c.l.b16 %v821
    %v901 = vunpack.c.h.b16 %v821
    %v902 = vunpack.c.l.b16 %v822
    %v903 = vunpack.c.h.b16 %v822
    %v904 = vunpack.c.l.b16 %v823
    %v905 = vunpack.c.h.b16 %v823
    %v906 = vunpack.c.l.b16 %v824
    %v907 = vunpack.c.h.b16 %v824
    %v908 = vunpack.c.l.b16 %v825
    %v909 = vunpack.c.h.b16 %v825
    %v910 = vunpack.c.l.b16 %v826
    %v911 = vunpack.c.h.b16 %v826
    %v912 = vunpack.c.l.b16 %v827
    %v913 = vunpack.c.h.b16 %v827
    %v914 = vunpack.c.l.b16 %v828
    %v915 = vunpack.c.h.b16 %v828
    %v916 = vunpack.c.l.b16 %v829
    %v917 = vunpack.c.h.b16 %v829
    %v918 = vunpack.c.l.b16 %v830
    %v919 = vunpack.c.h.b16 %v830
    %v920 = vunpack.c.l.b16 %v831
    %v921 = vunpack.c.h.b16 %v831
    %v922 = vunpack.c.l.b16 %v832
    %v923 = vunpack.c.h.b16 %v832
    %v924 = vunpack.c.l.b16 %v833
    %v925 = vunpack.c.h.b16 %v833
    %v926 = vunpack.c.l.b16 %v834
    %v927 = vunpack.c.h.b16 %v834
    %v928 = vunpack.c.l.b16 %v835
    %v929 = vunpack.c.h.b16 %v835
    %v930 = vunpack.c.l.b16 %v836
    %v931 = vunpack.c.h.b16 %v836
    %v932 = vunpack.c.l.b16 %v837
    %v933 = vunpack.c.h.b16 %v837
    %v934 = vunpack.c.l.b16 %v838
    %v935 = vunpack.c.h.b16 %v838
    %v936 = vpack.c.b16 %v876, %v872
    %v937 = vpack.c.b16 %v877, %v873
    %v938 = vpack.c.b16 %v878, %v874
    %v939 = vpack.c.b16 %v879, %v875
    %v940 = vpack.c.b16 %v884, %v880
    %v941 = vpack.c.b16 %v885, %v881
    %v942 = vpack.c.b16 %v886, %v882
    %v943 = vpack.c.b16 %v887, %v883
    %v944 = vpack.c.b16 %v892, %v888
    %v945 = vpack.c.b16 %v893, %v889
    %v946 = vpack.c.b16 %v894, %v890
    %v947 = vpack.c.b16 %v895, %v891
    %v948 = vpack.c.b16 %v900, %v896
    %v949 = vpack.c.b16 %v901, %v897
    %v950 = vpack.c.b16 %v902, %v898
    %v951 = vpack.c.b16 %v903, %v899
    %v952 = vpack.c.b16 %v908, %v904
    %v953 = vpack.c.b16 %v909, %v905
    %v954 = vpack.c.b16 %v910, %v906
    %v955 = vpack.c.b16 %v911, %v907
    %v956 = vpack.c.b16 %v916, %v912
    %v957 = vpack.c.b16 %v917, %v913
    %v958 = vpack.c.b16 %v918, %v914
    %v959 = vpack.c.b16 %v919, %v915
    %v960 = vpack.c.b16 %v924, %v920
    %v961 = vpack.c.b16 %v925, %v921
    %v962 = vpack.c.b16 %v926, %v922
    %v963 = vpack.c.b16 %v927, %v923
    %v964 = vpack.c.b16 %v932, %v928
    %v965 = vpack.c.b16 %v933, %v929
    %v966 = vpack.c.b16 %v934, %v930
    %v967 = vpack.c.b16 %v935, %v931
    %1000 = vmatprep.subr.bf16.mxu0 %v937
    %1001 = vmatpush1.bf16.msra.mxu0 %v936
    %1002 = vmatprep.subr.bf16.mxu0 %v941
    %1003 = vmatpush1.bf16.msra.mxu0 %v940
    %1004 = vmatprep.subr.bf16.mxu0 %v945
    %1005 = vmatpush1.bf16.msra.mxu0 %v944
    %1006 = vmatprep.subr.bf16.mxu0 %v949
    %1007 = vmatpush1.bf16.msra.mxu0 %v948
    %1008 = vmatprep.subr.bf16.mxu0 %v953
    %1009 = vmatpush1.bf16.msra.mxu0 %v952
    %1010 = vmatprep.subr.bf16.mxu0 %v957
    %1011 = vmatpush1.bf16.msra.mxu0 %v956
    %1012 = vmatprep.subr.bf16.mxu0 %v961
    %1013 = vmatpush1.bf16.msra.mxu0 %v960
    %1014 = vmatprep.subr.bf16.mxu0 %v965
    %1015 = vmatpush1.bf16.msra.mxu0 %v964
    %1016 = vmatprep.subr.bf16.mxu0 0
    %1017 = vmatpush1.bf16.msra.mxu0 0
    %1018 = vmatprep.subr.bf16.mxu0 0
    %1019 = vmatpush1.bf16.msra.mxu0 0
    %1020 = vmatprep.subr.bf16.mxu0 0
    %1021 = vmatpush1.bf16.msra.mxu0 0
    %1022 = vmatprep.subr.bf16.mxu0 0
    %1023 = vmatpush1.bf16.msra.mxu0 0
    %1024 = vmatprep.subr.bf16.mxu0 0
    %1025 = vmatpush1.bf16.msra.mxu0 0
    %1026 = vmatprep.subr.bf16.mxu0 0
    %1027 = vmatpush1.bf16.msra.mxu0 0
    %1028 = vmatprep.subr.bf16.mxu0 0
    %1029 = vmatpush1.bf16.msra.mxu0 0
    %1030 = vmatprep.subr.bf16.mxu0 0
    %1031 = vmatpush1.bf16.msra.mxu0 0
    %1032 = vmatprep.mubr.bf16.mxu0 0
    %1033 = vmatmul.mubr.bf16.gmra.mrb[0].mxu0 0
    %v1034 = vpop.f32.mrb[0].mxu0
    %v1035 = vadd.f32 0.0, %v1034
    %v1036 = vpop.f32.mrb[0].mxu0
    %v1037 = vadd.f32 0.0, %v1036
    %v1038 = vpop.f32.mrb[0].mxu0
    %v1039 = vpop.f32.mrb[0].mxu0
    %1040 = vdwg.mxu0
    %1041 = vmatprep.subr.bf16.mxu0 %v939
    %1042 = vmatpush1.bf16.msra.mxu0 %v938
    %1043 = vmatprep.subr.bf16.mxu0 %v943
    %1044 = vmatpush1.bf16.msra.mxu0 %v942
    %1045 = vmatprep.subr.bf16.mxu0 %v947
    %1046 = vmatpush1.bf16.msra.mxu0 %v946
    %1047 = vmatprep.subr.bf16.mxu0 %v951
    %1048 = vmatpush1.bf16.msra.mxu0 %v950
    %1049 = vmatprep.subr.bf16.mxu0 %v955
    %1050 = vmatpush1.bf16.msra.mxu0 %v954
    %1051 = vmatprep.subr.bf16.mxu0 %v959
    %1052 = vmatpush1.bf16.msra.mxu0 %v958
    %1053 = vmatprep.subr.bf16.mxu0 %v963
    %1054 = vmatpush1.bf16.msra.mxu0 %v962
    %1055 = vmatprep.subr.bf16.mxu0 %v967
    %1056 = vmatpush1.bf16.msra.mxu0 %v966
    %1057 = vmatprep.subr.bf16.mxu0 0
    %1058 = vmatpush1.bf16.msra.mxu0 0
    %1059 = vmatprep.subr.bf16.mxu0 0
    %1060 = vmatpush1.bf16.msra.mxu0 0
    %1061 = vmatprep.subr.bf16.mxu0 0
    %1062 = vmatpush1.bf16.msra.mxu0 0
    %1063 = vmatprep.subr.bf16.mxu0 0
    %1064 = vmatpush1.bf16.msra.mxu0 0
    %1065 = vmatprep.subr.bf16.mxu0 0
    %1066 = vmatpush1.bf16.msra.mxu0 0
    %1067 = vmatprep.subr.bf16.mxu0 0
    %1068 = vmatpush1.bf16.msra.mxu0 0
    %1069 = vmatprep.subr.bf16.mxu0 0
    %1070 = vmatpush1.bf16.msra.mxu0 0
    %1071 = vmatprep.subr.bf16.mxu0 0
    %1072 = vmatpush1.bf16.msra.mxu0 0
    %1073 = vmatprep.mubr.bf16.mxu0 0
    %1074 = vmatmul.mubr.bf16.gmra.mrb[0].mxu0 0
    %v1075 = vpop.f32.mrb[0].mxu0
    %v1076 = vadd.f32 0.0, %v1075
    %v1077 = vpop.f32.mrb[0].mxu0
    %v1078 = vadd.f32 0.0, %v1077
    %v1079 = vpop.f32.mrb[0].mxu0
    %v1080 = vpop.f32.mrb[0].mxu0
    %1081 = vdwg.mxu0
    %v1082 = vadd.f32 %v696, %v1035
    %v1083 = vadd.f32 %v698, %v1037
    %v1084 = vadd.f32 %v769, %v1076
    %v1085 = vadd.f32 %v771, %v1078
    %v1086 = vsub.f32 0.0, %v1082
    %v1087 = vmul.f32 %v1086, 1.442695
    %v1088 = vpow.pop %v1087
    %v1089 = vadd.f32 %v1088, 1.0
    %v1090 = vrcp.pop %v1089
    %v1091 = vmul.f32 1.0, %v1090
    %v1092 = vsub.f32 0.0, %v1083
    %v1093 = vmul.f32 %v1092, 1.442695
    %v1094 = vpow.pop %v1093
    %v1095 = vadd.f32 %v1094, 1.0
    %v1096 = vrcp.pop %v1095
    %v1097 = vmul.f32 1.0, %v1096
    %v1098 = vtanh.pop %v1084
    %v1099 = vsub.f32 0.0, %v1085
    %v1100 = vmul.f32 %v1099, 1.442695
    %v1101 = vpow.pop %v1100
    %v1102 = vadd.f32 %v1101, 1.0
    %v1103 = vrcp.pop %v1102
    %v1104 = vmul.f32 1.0, %v1103
    %v1105 = vmul.f32 %v1097, 0.0
    %v1106 = vmul.f32 %v1091, %v1098
    %v1107 = vadd.f32 %v1105, %v1106
    %v1108 = vtanh.pop %v1107
    %v1109 = vmul.f32 %v1104, %v1108
    %1110 = vst [vmem:[#allocation13] sm:$0xff] %v1109
    %vm1111 = vcmp.eq.f32.partialorder %v839, 0.0
    %v1112 = vsel %vm1111, %v1109, 0.0
    %v1113 = vadd.f32 %v1112, 0.0
    %v1114 = vpack.c.bf16 %v1109, %v1109
    %1115 = vmatprep.subr.bf16.mxu0 %v937
    %1116 = vmatpush1.bf16.msra.mxu0 %v936
    %1117 = vmatprep.subr.bf16.mxu0 %v941
    %1118 = vmatpush1.bf16.msra.mxu0 %v940
    %1119 = vmatprep.subr.bf16.mxu0 %v945
    %1120 = vmatpush1.bf16.msra.mxu0 %v944
    %1121 = vmatprep.subr.bf16.mxu0 %v949
    %1122 = vmatpush1.bf16.msra.mxu0 %v948
    %1123 = vmatprep.subr.bf16.mxu0 %v953
    %1124 = vmatpush1.bf16.msra.mxu0 %v952
    %1125 = vmatprep.subr.bf16.mxu0 %v957
    %1126 = vmatpush1.bf16.msra.mxu0 %v956
    %1127 = vmatprep.subr.bf16.mxu0 %v961
    %1128 = vmatpush1.bf16.msra.mxu0 %v960
    %1129 = vmatprep.subr.bf16.mxu0 %v965
    %1130 = vmatpush1.bf16.msra.mxu0 %v964
    %1131 = vmatprep.subr.bf16.mxu0 0
    %1132 = vmatpush1.bf16.msra.mxu0 0
    %1133 = vmatprep.subr.bf16.mxu0 0
    %1134 = vmatpush1.bf16.msra.mxu0 0
    %1135 = vmatprep.subr.bf16.mxu0 0
    %1136 = vmatpush1.bf16.msra.mxu0 0
    %1137 = vmatprep.subr.bf16.mxu0 0
    %1138 = vmatpush1.bf16.msra.mxu0 0
    %1139 = vmatprep.subr.bf16.mxu0 0
    %1140 = vmatpush1.bf16.msra.mxu0 0
    %1141 = vmatprep.subr.bf16.mxu0 0
    %1142 = vmatpush1.bf16.msra.mxu0 0
    %1143 = vmatprep.subr.bf16.mxu0 0
    %1144 = vmatpush1.bf16.msra.mxu0 0
    %1145 = vmatprep.subr.bf16.mxu0 0
    %1146 = vmatpush1.bf16.msra.mxu0 0
    %1147 = vmatprep.mubr.bf16.mxu0 0
    %1148 = vmatmul.mubr.bf16.gmra.mrb[0].mxu0 %v1114
    %v1149 = vpop.f32.mrb[0].mxu0
    %v1150 = vadd.f32 0.0, %v1149
    %v1151 = vpop.f32.mrb[0].mxu0
    %v1152 = vadd.f32 0.0, %v1151
    %v1153 = vpop.f32.mrb[0].mxu0
    %v1154 = vpop.f32.mrb[0].mxu0
    %1155 = vdwg.mxu0
    %1156 = vmatprep.subr.bf16.mxu0 %v939
    %1157 = vmatpush1.bf16.msra.mxu0 %v938
    %1158 = vmatprep.subr.bf16.mxu0 %v943
    %1159 = vmatpush1.bf16.msra.mxu0 %v942
    %1160 = vmatprep.subr.bf16.mxu0 %v947
    %1161 = vmatpush1.bf16.msra.mxu0 %v946
    %1162 = vmatprep.subr.bf16.mxu0 %v951
    %1163 = vmatpush1.bf16.msra.mxu0 %v950
    %1164 = vmatprep.subr.bf16.mxu0 %v955
    %1165 = vmatpush1.bf16.msra.mxu0 %v954
    %1166 = vmatprep.subr.bf16.mxu0 %v959
    %1167 = vmatpush1.bf16.msra.mxu0 %v958
    %1168 = vmatprep.subr.bf16.mxu0 %v963
    %1169 = vmatpush1.bf16.msra.mxu0 %v962
    %1170 = vmatprep.subr.bf16.mxu0 %v967
    %1171 = vmatpush1.bf16.msra.mxu0 %v966
    %1172 = vmatprep.subr.bf16.mxu0 0
    %1173 = vmatpush1.bf16.msra.mxu0 0
    %1174 = vmatprep.subr.bf16.mxu0 0
    %1175 = vmatpush1.bf16.msra.mxu0 0
    %1176 = vmatprep.subr.bf16.mxu0 0
    %1177 = vmatpush1.bf16.msra.mxu0 0
    %1178 = vmatprep.subr.bf16.mxu0 0
    %1179 = vmatpush1.bf16.msra.mxu0 0
    %1180 = vmatprep.subr.bf16.mxu0 0
    %1181 = vmatpush1.bf16.msra.mxu0 0
    %1182 = vmatprep.subr.bf16.mxu0 0
    %1183 = vmatpush1.bf16.msra.mxu0 0
    %1184 = vmatprep.subr.bf16.mxu0 0
    %1185 = vmatpush1.bf16.msra.mxu0 0
    %1186 = vmatprep.subr.bf16.mxu0 0
    %1187 = vmatpush1.bf16.msra.mxu0 0
    %1188 = vmatprep.mubr.bf16.mxu0 0
    %1189 = vmatmul.mubr.bf16.gmra.mrb[0].mxu0 %v1114
    %v1190 = vpop.f32.mrb[0].mxu0
    %v1191 = vadd.f32 0.0, %v1190
    %v1192 = vpop.f32.mrb[0].mxu0
    %v1193 = vadd.f32 0.0, %v1192
    %v1194 = vpop.f32.mrb[0].mxu0
    %v1195 = vpop.f32.mrb[0].mxu0
    %1196 = vdwg.mxu0
    %v1197 = vadd.f32 %v700, %v1150
    %v1198 = vadd.f32 %v702, %v1152
    %v1199 = vadd.f32 %v773, %v1191
    %v1200 = vadd.f32 %v775, %v1193
    %v1201 = vsub.f32 0.0, %v1197
    %v1202 = vmul.f32 %v1201, 1.442695
    %v1203 = vpow.pop %v1202
    %v1204 = vadd.f32 %v1203, 1.0
    %v1205 = vrcp.pop %v1204
    %v1206 = vmul.f32 1.0, %v1205
    %v1207 = vsub.f32 0.0, %v1198
    %v1208 = vmul.f32 %v1207, 1.442695
    %v1209 = vpow.pop %v1208
    %v1210 = vadd.f32 %v1209, 1.0
    %v1211 = vrcp.pop %v1210
    %v1212 = vmul.f32 1.0, %v1211
    %v1213 = vtanh.pop %v1199
    %v1214 = vsub.f32 0.0, %v1200
    %v1215 = vmul.f32 %v1214, 1.442695
    %v1216 = vpow.pop %v1215
    %v1217 = vadd.f32 %v1216, 1.0
    %v1218 = vrcp.pop %v1217
    %v1219 = vmul.f32 1.0, %v1218
    %v1220 = vmul.f32 %v1212, %v1107
    %v1221 = vmul.f32 %v1206, %v1213
    %v1222 = vadd.f32 %v1220, %v1221
    %v1223 = vtanh.pop %v1222
    %v1224 = vmul.f32 %v1219, %v1223
    %1225 = vst [vmem:[#allocation13 + $0x8] sm:$0xff] %v1224
    %vm1226 = vcmp.eq.f32.partialorder %v839, 1.0
    %v1227 = vsel %vm1226, %v1224, 0.0
    %v1228 = vadd.f32 %v1113, %v1227
    %v1229 = vpack.c.bf16 %v1224, %v1224
    %1230 = vmatprep.subr.bf16.mxu0 %v937
    %1231 = vmatpush1.bf16.msra.mxu0 %v936
    %1232 = vmatprep.subr.bf16.mxu0 %v941
    %1233 = vmatpush1.bf16.msra.mxu0 %v940
    %1234 = vmatprep.subr.bf16.mxu0 %v945
    %1235 = vmatpush1.bf16.msra.mxu0 %v944
    %1236 = vmatprep.subr.bf16.mxu0 %v949
    %1237 = vmatpush1.bf16.msra.mxu0 %v948
    %1238 = vmatprep.subr.bf16.mxu0 %v953
    %1239 = vmatpush1.bf16.msra.mxu0 %v952
    %1240 = vmatprep.subr.bf16.mxu0 %v957
    %1241 = vmatpush1.bf16.msra.mxu0 %v956
    %1242 = vmatprep.subr.bf16.mxu0 %v961
    %1243 = vmatpush1.bf16.msra.mxu0 %v960
    %1244 = vmatprep.subr.bf16.mxu0 %v965
    %1245 = vmatpush1.bf16.msra.mxu0 %v964
    %1246 = vmatprep.subr.bf16.mxu0 0
    %1247 = vmatpush1.bf16.msra.mxu0 0
    %1248 = vmatprep.subr.bf16.mxu0 0
    %1249 = vmatpush1.bf16.msra.mxu0 0
    %1250 = vmatprep.subr.bf16.mxu0 0
    %1251 = vmatpush1.bf16.msra.mxu0 0
    %1252 = vmatprep.subr.bf16.mxu0 0
    %1253 = vmatpush1.bf16.msra.mxu0 0
    %1254 = vmatprep.subr.bf16.mxu0 0
    %1255 = vmatpush1.bf16.msra.mxu0 0
    %1256 = vmatprep.subr.bf16.mxu0 0
    %1257 = vmatpush1.bf16.msra.mxu0 0
    %1258 = vmatprep.subr.bf16.mxu0 0
    %1259 = vmatpush1.bf16.msra.mxu0 0
    %1260 = vmatprep.subr.bf16.mxu0 0
    %1261 = vmatpush1.bf16.msra.mxu0 0
    %1262 = vmatprep.mubr.bf16.mxu0 0
    %1263 = vmatmul.mubr.bf16.gmra.mrb[0].mxu0 %v1229
    %v1264 = vpop.f32.mrb[0].mxu0
    %v1265 = vadd.f32 0.0, %v1264
    %v1266 = vpop.f32.mrb[0].mxu0
    %v1267 = vadd.f32 0.0, %v1266
    %v1268 = vpop.f32.mrb[0].mxu0
    %v1269 = vpop.f32.mrb[0].mxu0
    %1270 = vdwg.mxu0
    %1271 = vmatprep.subr.bf16.mxu0 %v939
    %1272 = vmatpush1.bf16.msra.mxu0 %v938
    %1273 = vmatprep.subr.bf16.mxu0 %v943
    %1274 = vmatpush1.bf16.msra.mxu0 %v942
    %1275 = vmatprep.subr.bf16.mxu0 %v947
    %1276 = vmatpush1.bf16.msra.mxu0 %v946
    %1277 = vmatprep.subr.bf16.mxu0 %v951
    %1278 = vmatpush1.bf16.msra.mxu0 %v950
    %1279 = vmatprep.subr.bf16.mxu0 %v955
    %1280 = vmatpush1.bf16.msra.mxu0 %v954
    %1281 = vmatprep.subr.bf16.mxu0 %v959
    %1282 = vmatpush1.bf16.msra.mxu0 %v958
    %1283 = vmatprep.subr.bf16.mxu0 %v963
    %1284 = vmatpush1.bf16.msra.mxu0 %v962
    %1285 = vmatprep.subr.bf16.mxu0 %v967
    %1286 = vmatpush1.bf16.msra.mxu0 %v966
    %1287 = vmatprep.subr.bf16.mxu0 0
    %1288 = vmatpush1.bf16.msra.mxu0 0
    %1289 = vmatprep.subr.bf16.mxu0 0
    %1290 = vmatpush1.bf16.msra.mxu0 0
    %1291 = vmatprep.subr.bf16.mxu0 0
    %1292 = vmatpush1.bf16.msra.mxu0 0
    %1293 = vmatprep.subr.bf16.mxu0 0
    %1294 = vmatpush1.bf16.msra.mxu0 0
    %1295 = vmatprep.subr.bf16.mxu0 0
    %1296 = vmatpush1.bf16.msra.mxu0 0
    %1297 = vmatprep.subr.bf16.mxu0 0
    %1298 = vmatpush1.bf16.msra.mxu0 0
    %1299 = vmatprep.subr.bf16.mxu0 0
    %1300 = vmatpush1.bf16.msra.mxu0 0
    %1301 = vmatprep.subr.bf16.mxu0 0
    %1302 = vmatpush1.bf16.msra.mxu0 0
    %1303 = vmatprep.mubr.bf16.mxu0 0
    %1304 = vmatmul.mubr.bf16.gmra.mrb[0].mxu0 %v1229
    %v1305 = vpop.f32.mrb[0].mxu0
    %v1306 = vadd.f32 0.0, %v1305
    %v1307 = vpop.f32.mrb[0].mxu0
    %v1308 = vadd.f32 0.0, %v1307
    %v1309 = vpop.f32.mrb[0].mxu0
    %v1310 = vpop.f32.mrb[0].mxu0
    %1311 = vdwg.mxu0
    %v1312 = vadd.f32 %v706, %v1265
    %v1313 = vadd.f32 %v708, %v1267
    %v1314 = vadd.f32 %v779, %v1306
    %v1315 = vadd.f32 %v781, %v1308
    %v1316 = vsub.f32 0.0, %v1312
    %v1317 = vmul.f32 %v1316, 1.442695
    %v1318 = vpow.pop %v1317
    %v1319 = vadd.f32 %v1318, 1.0
    %v1320 = vrcp.pop %v1319
    %v1321 = vmul.f32 1.0, %v1320
    %v1322 = vsub.f32 0.0, %v1313
    %v1323 = vmul.f32 %v1322, 1.442695
    %v1324 = vpow.pop %v1323
    %v1325 = vadd.f32 %v1324, 1.0
    %v1326 = vrcp.pop %v1325
    %v1327 = vmul.f32 1.0, %v1326
    %v1328 = vtanh.pop %v1314
    %v1329 = vsub.f32 0.0, %v1315
    %v1330 = vmul.f32 %v1329, 1.442695
    %v1331 = vpow.pop %v1330
    %v1332 = vadd.f32 %v1331, 1.0
    %v1333 = vrcp.pop %v1332
    %v1334 = vmul.f32 1.0, %v1333
    %v1335 = vmul.f32 %v1327, %v1222
    %v1336 = vmul.f32 %v1321, %v1328
    %v1337 = vadd.f32 %v1335, %v1336
    %v1338 = vtanh.pop %v1337
    %v1339 = vmul.f32 %v1334, %v1338
    %1340 = vst [vmem:[#allocation13 + $0x10] sm:$0xff] %v1339
    %vm1341 = vcmp.eq.f32.partialorder %v839, 2.0
    %v1342 = vsel %vm1341, %v1339, 0.0
    %v1343 = vadd.f32 %v1228, %v1342
    %v1344 = vpack.c.bf16 %v1339, %v1339
    %1345 = vmatprep.subr.bf16.mxu0 %v937
    %1346 = vmatpush1.bf16.msra.mxu0 %v936
    %1347 = vmatprep.subr.bf16.mxu0 %v941
    %1348 = vmatpush1.bf16.msra.mxu0 %v940
    %1349 = vmatprep.subr.bf16.mxu0 %v945
    %1350 = vmatpush1.bf16.msra.mxu0 %v944
    %1351 = vmatprep.subr.bf16.mxu0 %v949
    %1352 = vmatpush1.bf16.msra.mxu0 %v948
    %1353 = vmatprep.subr.bf16.mxu0 %v953
    %1354 = vmatpush1.bf16.msra.mxu0 %v952
    %1355 = vmatprep.subr.bf16.mxu0 %v957
    %1356 = vmatpush1.bf16.msra.mxu0 %v956
    %1357 = vmatprep.subr.bf16.mxu0 %v961
    %1358 = vmatpush1.bf16.msra.mxu0 %v960
    %1359 = vmatprep.subr.bf16.mxu0 %v965
    %1360 = vmatpush1.bf16.msra.mxu0 %v964
    %1361 = vmatprep.subr.bf16.mxu0 0
    %1362 = vmatpush1.bf16.msra.mxu0 0
    %1363 = vmatprep.subr.bf16.mxu0 0
    %1364 = vmatpush1.bf16.msra.mxu0 0
    %1365 = vmatprep.subr.bf16.mxu0 0
    %1366 = vmatpush1.bf16.msra.mxu0 0
    %1367 = vmatprep.subr.bf16.mxu0 0
    %1368 = vmatpush1.bf16.msra.mxu0 0
    %1369 = vmatprep.subr.bf16.mxu0 0
    %1370 = vmatpush1.bf16.msra.mxu0 0
    %1371 = vmatprep.subr.bf16.mxu0 0
    %1372 = vmatpush1.bf16.msra.mxu0 0
    %1373 = vmatprep.subr.bf16.mxu0 0
    %1374 = vmatpush1.bf16.msra.mxu0 0
    %1375 = vmatprep.subr.bf16.mxu0 0
    %1376 = vmatpush1.bf16.msra.mxu0 0
    %1377 = vmatprep.mubr.bf16.mxu0 0
    %1378 = vmatmul.mubr.bf16.gmra.mrb[0].mxu0 %v1344
    %v1379 = vpop.f32.mrb[0].mxu0
    %v1380 = vadd.f32 0.0, %v1379
    %v1381 = vpop.f32.mrb[0].mxu0
    %v1382 = vadd.f32 0.0, %v1381
    %v1383 = vpop.f32.mrb[0].mxu0
    %v1384 = vpop.f32.mrb[0].mxu0
    %1385 = vdwg.mxu0
    %1386 = vmatprep.subr.bf16.mxu0 %v939
    %1387 = vmatpush1.bf16.msra.mxu0 %v938
    %1388 = vmatprep.subr.bf16.mxu0 %v943
    %1389 = vmatpush1.bf16.msra.mxu0 %v942
    %1390 = vmatprep.subr.bf16.mxu0 %v947
    %1391 = vmatpush1.bf16.msra.mxu0 %v946
    %1392 = vmatprep.subr.bf16.mxu0 %v951
    %1393 = vmatpush1.bf16.msra.mxu0 %v950
    %1394 = vmatprep.subr.bf16.mxu0 %v955
    %1395 = vmatpush1.bf16.msra.mxu0 %v954
    %1396 = vmatprep.subr.bf16.mxu0 %v959
    %1397 = vmatpush1.bf16.msra.mxu0 %v958
    %1398 = vmatprep.subr.bf16.mxu0 %v963
    %1399 = vmatpush1.bf16.msra.mxu0 %v962
    %1400 = vmatprep.subr.bf16.mxu0 %v967
    %1401 = vmatpush1.bf16.msra.mxu0 %v966
    %1402 = vmatprep.subr.bf16.mxu0 0
    %1403 = vmatpush1.bf16.msra.mxu0 0
    %1404 = vmatprep.subr.bf16.mxu0 0
    %1405 = vmatpush1.bf16.msra.mxu0 0
    %1406 = vmatprep.subr.bf16.mxu0 0
    %1407 = vmatpush1.bf16.msra.mxu0 0
    %1408 = vmatprep.subr.bf16.mxu0 0
    %1409 = vmatpush1.bf16.msra.mxu0 0
    %1410 = vmatprep.subr.bf16.mxu0 0
    %1411 = vmatpush1.bf16.msra.mxu0 0
    %1412 = vmatprep.subr.bf16.mxu0 0
    %1413 = vmatpush1.bf16.msra.mxu0 0
    %1414 = vmatprep.subr.bf16.mxu0 0
    %1415 = vmatpush1.bf16.msra.mxu0 0
    %1416 = vmatprep.subr.bf16.mxu0 0
    %1417 = vmatpush1.bf16.msra.mxu0 0
    %1418 = vmatprep.mubr.bf16.mxu0 0
    %1419 = vmatmul.mubr.bf16.gmra.mrb[0].mxu0 %v1344
    %v1420 = vpop.f32.mrb[0].mxu0
    %v1421 = vadd.f32 0.0, %v1420
    %v1422 = vpop.f32.mrb[0].mxu0
    %v1423 = vadd.f32 0.0, %v1422
    %v1424 = vpop.f32.mrb[0].mxu0
    %v1425 = vpop.f32.mrb[0].mxu0
    %1426 = vdwg.mxu0
    %v1427 = vadd.f32 %v710, %v1380
    %v1428 = vadd.f32 %v712, %v1382
    %v1429 = vadd.f32 %v783, %v1421
    %v1430 = vadd.f32 %v785, %v1423
    %v1431 = vsub.f32 0.0, %v1427
    %v1432 = vmul.f32 %v1431, 1.442695
    %v1433 = vpow.pop %v1432
    %v1434 = vadd.f32 %v1433, 1.0
    %v1435 = vrcp.pop %v1434
    %v1436 = vmul.f32 1.0, %v1435
    %v1437 = vsub.f32 0.0, %v1428
    %v1438 = vmul.f32 %v1437, 1.442695
    %v1439 = vpow.pop %v1438
    %v1440 = vadd.f32 %v1439, 1.0
    %v1441 = vrcp.pop %v1440
    %v1442 = vmul.f32 1.0, %v1441
    %v1443 = vtanh.pop %v1429
    %v1444 = vsub.f32 0.0, %v1430
    %v1445 = vmul.f32 %v1444, 1.442695
    %v1446 = vpow.pop %v1445
    %v1447 = vadd.f32 %v1446, 1.0
    %v1448 = vrcp.pop %v1447
    %v1449 = vmul.f32 1.0, %v1448
    %v1450 = vmul.f32 %v1442, %v1337
    %v1451 = vmul.f32 %v1436, %v1443
    %v1452 = vadd.f32 %v1450, %v1451
    %v1453 = vtanh.pop %v1452
    %v1454 = vmul.f32 %v1449, %v1453
    %1455 = vst [vmem:[#allocation13 + $0x18] sm:$0xff] %v1454
    %vm1456 = vcmp.eq.f32.partialorder %v839, 3.0
    %v1457 = vsel %vm1456, %v1454, 0.0
    %v1458 = vadd.f32 %v1343, %v1457
    %v1459 = vpack.c.bf16 %v1454, %v1454
    %1460 = vmatprep.subr.bf16.mxu0 %v937
    %1461 = vmatpush1.bf16.msra.mxu0 %v936
    %1462 = vmatprep.subr.bf16.mxu0 %v941
    %1463 = vmatpush1.bf16.msra.mxu0 %v940
    %1464 = vmatprep.subr.bf16.mxu0 %v945
    %1465 = vmatpush1.bf16.msra.mxu0 %v944
    %1466 = vmatprep.subr.bf16.mxu0 %v949
    %1467 = vmatpush1.bf16.msra.mxu0 %v948
    %1468 = vmatprep.subr.bf16.mxu0 %v953
    %1469 = vmatpush1.bf16.msra.mxu0 %v952
    %1470 = vmatprep.subr.bf16.mxu0 %v957
    %1471 = vmatpush1.bf16.msra.mxu0 %v956
    %1472 = vmatprep.subr.bf16.mxu0 %v961
    %1473 = vmatpush1.bf16.msra.mxu0 %v960
    %1474 = vmatprep.subr.bf16.mxu0 %v965
    %1475 = vmatpush1.bf16.msra.mxu0 %v964
    %1476 = vmatprep.subr.bf16.mxu0 0
    %1477 = vmatpush1.bf16.msra.mxu0 0
    %1478 = vmatprep.subr.bf16.mxu0 0
    %1479 = vmatpush1.bf16.msra.mxu0 0
    %1480 = vmatprep.subr.bf16.mxu0 0
    %1481 = vmatpush1.bf16.msra.mxu0 0
    %1482 = vmatprep.subr.bf16.mxu0 0
    %1483 = vmatpush1.bf16.msra.mxu0 0
    %1484 = vmatprep.subr.bf16.mxu0 0
    %1485 = vmatpush1.bf16.msra.mxu0 0
    %1486 = vmatprep.subr.bf16.mxu0 0
    %1487 = vmatpush1.bf16.msra.mxu0 0
    %1488 = vmatprep.subr.bf16.mxu0 0
    %1489 = vmatpush1.bf16.msra.mxu0 0
    %1490 = vmatprep.subr.bf16.mxu0 0
    %1491 = vmatpush1.bf16.msra.mxu0 0
    %1492 = vmatprep.mubr.bf16.mxu0 0
    %1493 = vmatmul.mubr.bf16.gmra.mrb[0].mxu0 %v1459
    %v1494 = vpop.f32.mrb[0].mxu0
    %v1495 = vadd.f32 0.0, %v1494
    %v1496 = vpop.f32.mrb[0].mxu0
    %v1497 = vadd.f32 0.0, %v1496
    %v1498 = vpop.f32.mrb[0].mxu0
    %v1499 = vpop.f32.mrb[0].mxu0
    %1500 = vdwg.mxu0
    %1501 = vmatprep.subr.bf16.mxu0 %v939
    %1502 = vmatpush1.bf16.msra.mxu0 %v938
    %1503 = vmatprep.subr.bf16.mxu0 %v943
    %1504 = vmatpush1.bf16.msra.mxu0 %v942
    %1505 = vmatprep.subr.bf16.mxu0 %v947
    %1506 = vmatpush1.bf16.msra.mxu0 %v946
    %1507 = vmatprep.subr.bf16.mxu0 %v951
    %1508 = vmatpush1.bf16.msra.mxu0 %v950
    %1509 = vmatprep.subr.bf16.mxu0 %v955
    %1510 = vmatpush1.bf16.msra.mxu0 %v954
    %1511 = vmatprep.subr.bf16.mxu0 %v959
    %1512 = vmatpush1.bf16.msra.mxu0 %v958
    %1513 = vmatprep.subr.bf16.mxu0 %v963
    %1514 = vmatpush1.bf16.msra.mxu0 %v962
    %1515 = vmatprep.subr.bf16.mxu0 %v967
    %1516 = vmatpush1.bf16.msra.mxu0 %v966
    %1517 = vmatprep.subr.bf16.mxu0 0
    %1518 = vmatpush1.bf16.msra.mxu0 0
    %1519 = vmatprep.subr.bf16.mxu0 0
    %1520 = vmatpush1.bf16.msra.mxu0 0
    %1521 = vmatprep.subr.bf16.mxu0 0
    %1522 = vmatpush1.bf16.msra.mxu0 0
    %1523 = vmatprep.subr.bf16.mxu0 0
    %1524 = vmatpush1.bf16.msra.mxu0 0
    %1525 = vmatprep.subr.bf16.mxu0 0
    %1526 = vmatpush1.bf16.msra.mxu0 0
    %1527 = vmatprep.subr.bf16.mxu0 0
    %1528 = vmatpush1.bf16.msra.mxu0 0
    %1529 = vmatprep.subr.bf16.mxu0 0
    %1530 = vmatpush1.bf16.msra.mxu0 0
    %1531 = vmatprep.subr.bf16.mxu0 0
    %1532 = vmatpush1.bf16.msra.mxu0 0
    %1533 = vmatprep.mubr.bf16.mxu0 0
    %1534 = vmatmul.mubr.bf16.gmra.mrb[0].mxu0 %v1459
    %v1535 = vpop.f32.mrb[0].mxu0
    %v1536 = vadd.f32 0.0, %v1535
    %v1537 = vpop.f32.mrb[0].mxu0
    %v1538 = vadd.f32 0.0, %v1537
    %v1539 = vpop.f32.mrb[0].mxu0
    %v1540 = vpop.f32.mrb[0].mxu0
    %1541 = vdwg.mxu0
    %v1542 = vadd.f32 %v716, %v1495
    %v1543 = vadd.f32 %v718, %v1497
    %v1544 = vadd.f32 %v789, %v1536
    %v1545 = vadd.f32 %v791, %v1538
    %v1546 = vsub.f32 0.0, %v1542
    %v1547 = vmul.f32 %v1546, 1.442695
    %v1548 = vpow.pop %v1547
    %v1549 = vadd.f32 %v1548, 1.0
    %v1550 = vrcp.pop %v1549
    %v1551 = vmul.f32 1.0, %v1550
    %v1552 = vsub.f32 0.0, %v1543
    %v1553 = vmul.f32 %v1552, 1.442695
    %v1554 = vpow.pop %v1553
    %v1555 = vadd.f32 %v1554, 1.0
    %v1556 = vrcp.pop %v1555
    %v1557 = vmul.f32 1.0, %v1556
    %v1558 = vtanh.pop %v1544
    %v1559 = vsub.f32 0.0, %v1545
    %v1560 = vmul.f32 %v1559, 1.442695
    %v1561 = vpow.pop %v1560
    %v1562 = vadd.f32 %v1561, 1.0
    %v1563 = vrcp.pop %v1562
    %v1564 = vmul.f32 1.0, %v1563
    %v1565 = vmul.f32 %v1557, %v1452
    %v1566 = vmul.f32 %v1551, %v1558
    %v1567 = vadd.f32 %v1565, %v1566
    %v1568 = vtanh.pop %v1567
    %v1569 = vmul.f32 %v1564, %v1568
    %1570 = vst [vmem:[#allocation13 + $0x20] sm:$0xff] %v1569
    %vm1571 = vcmp.eq.f32.partialorder %v839, 4.0
    %v1572 = vsel %vm1571, %v1569, 0.0
    %v1573 = vadd.f32 %v1458, %v1572
    %v1574 = vpack.c.bf16 %v1569, %v1569
    %1575 = vmatprep.subr.bf16.mxu0 %v937
    %1576 = vmatpush1.bf16.msra.mxu0 %v936
    %1577 = vmatprep.subr.bf16.mxu0 %v941
    %1578 = vmatpush1.bf16.msra.mxu0 %v940
    %1579 = vmatprep.subr.bf16.mxu0 %v945
    %1580 = vmatpush1.bf16.msra.mxu0 %v944
    %1581 = vmatprep.subr.bf16.mxu0 %v949
    %1582 = vmatpush1.bf16.msra.mxu0 %v948
    %1583 = vmatprep.subr.bf16.mxu0 %v953
    %1584 = vmatpush1.bf16.msra.mxu0 %v952
    %1585 = vmatprep.subr.bf16.mxu0 %v957
    %1586 = vmatpush1.bf16.msra.mxu0 %v956
    %1587 = vmatprep.subr.bf16.mxu0 %v961
    %1588 = vmatpush1.bf16.msra.mxu0 %v960
    %1589 = vmatprep.subr.bf16.mxu0 %v965
    %1590 = vmatpush1.bf16.msra.mxu0 %v964
    %1591 = vmatprep.subr.bf16.mxu0 0
    %1592 = vmatpush1.bf16.msra.mxu0 0
    %1593 = vmatprep.subr.bf16.mxu0 0
    %1594 = vmatpush1.bf16.msra.mxu0 0
    %1595 = vmatprep.subr.bf16.mxu0 0
    %1596 = vmatpush1.bf16.msra.mxu0 0
    %1597 = vmatprep.subr.bf16.mxu0 0
    %1598 = vmatpush1.bf16.msra.mxu0 0
    %1599 = vmatprep.subr.bf16.mxu0 0
    %1600 = vmatpush1.bf16.msra.mxu0 0
    %1601 = vmatprep.subr.bf16.mxu0 0
    %1602 = vmatpush1.bf16.msra.mxu0 0
    %1603 = vmatprep.subr.bf16.mxu0 0
    %1604 = vmatpush1.bf16.msra.mxu0 0
    %1605 = vmatprep.subr.bf16.mxu0 0
    %1606 = vmatpush1.bf16.msra.mxu0 0
    %1607 = vmatprep.mubr.bf16.mxu0 0
    %1608 = vmatmul.mubr.bf16.gmra.mrb[0].mxu0 %v1574
    %v1609 = vpop.f32.mrb[0].mxu0
    %v1610 = vadd.f32 0.0, %v1609
    %v1611 = vpop.f32.mrb[0].mxu0
    %v1612 = vadd.f32 0.0, %v1611
    %v1613 = vpop.f32.mrb[0].mxu0
    %v1614 = vpop.f32.mrb[0].mxu0
    %1615 = vdwg.mxu0
    %1616 = vmatprep.subr.bf16.mxu0 %v939
    %1617 = vmatpush1.bf16.msra.mxu0 %v938
    %1618 = vmatprep.subr.bf16.mxu0 %v943
    %1619 = vmatpush1.bf16.msra.mxu0 %v942
    %1620 = vmatprep.subr.bf16.mxu0 %v947
    %1621 = vmatpush1.bf16.msra.mxu0 %v946
    %1622 = vmatprep.subr.bf16.mxu0 %v951
    %1623 = vmatpush1.bf16.msra.mxu0 %v950
    %1624 = vmatprep.subr.bf16.mxu0 %v955
    %1625 = vmatpush1.bf16.msra.mxu0 %v954
    %1626 = vmatprep.subr.bf16.mxu0 %v959
    %1627 = vmatpush1.bf16.msra.mxu0 %v958
    %1628 = vmatprep.subr.bf16.mxu0 %v963
    %1629 = vmatpush1.bf16.msra.mxu0 %v962
    %1630 = vmatprep.subr.bf16.mxu0 %v967
    %1631 = vmatpush1.bf16.msra.mxu0 %v966
    %1632 = vmatprep.subr.bf16.mxu0 0
    %1633 = vmatpush1.bf16.msra.mxu0 0
    %1634 = vmatprep.subr.bf16.mxu0 0
    %1635 = vmatpush1.bf16.msra.mxu0 0
    %1636 = vmatprep.subr.bf16.mxu0 0
    %1637 = vmatpush1.bf16.msra.mxu0 0
    %1638 = vmatprep.subr.bf16.mxu0 0
    %1639 = vmatpush1.bf16.msra.mxu0 0
    %1640 = vmatprep.subr.bf16.mxu0 0
    %1641 = vmatpush1.bf16.msra.mxu0 0
    %1642 = vmatprep.subr.bf16.mxu0 0
    %1643 = vmatpush1.bf16.msra.mxu0 0
    %1644 = vmatprep.subr.bf16.mxu0 0
    %1645 = vmatpush1.bf16.msra.mxu0 0
    %1646 = vmatprep.subr.bf16.mxu0 0
    %1647 = vmatpush1.bf16.msra.mxu0 0
    %1648 = vmatprep.mubr.bf16.mxu0 0
    %1649 = vmatmul.mubr.bf16.gmra.mrb[0].mxu0 %v1574
    %v1650 = vpop.f32.mrb[0].mxu0
    %v1651 = vadd.f32 0.0, %v1650
    %v1652 = vpop.f32.mrb[0].mxu0
    %v1653 = vadd.f32 0.0, %v1652
    %v1654 = vpop.f32.mrb[0].mxu0
    %v1655 = vpop.f32.mrb[0].mxu0
    %1656 = vdwg.mxu0
    %v1657 = vadd.f32 %v720, %v1610
    %v1658 = vadd.f32 %v722, %v1612
    %v1659 = vadd.f32 %v793, %v1651
    %v1660 = vadd.f32 %v795, %v1653
    %v1661 = vsub.f32 0.0, %v1657
    %v1662 = vmul.f32 %v1661, 1.442695
    %v1663 = vpow.pop %v1662
    %v1664 = vadd.f32 %v1663, 1.0
    %v1665 = vrcp.pop %v1664
    %v1666 = vmul.f32 1.0, %v1665
    %v1667 = vsub.f32 0.0, %v1658
    %v1668 = vmul.f32 %v1667, 1.442695
    %v1669 = vpow.pop %v1668
    %v1670 = vadd.f32 %v1669, 1.0
    %v1671 = vrcp.pop %v1670
    %v1672 = vmul.f32 1.0, %v1671
    %v1673 = vtanh.pop %v1659
    %v1674 = vsub.f32 0.0, %v1660
    %v1675 = vmul.f32 %v1674, 1.442695
    %v1676 = vpow.pop %v1675
    %v1677 = vadd.f32 %v1676, 1.0
    %v1678 = vrcp.pop %v1677
    %v1679 = vmul.f32 1.0, %v1678
    %v1680 = vmul.f32 %v1672, %v1567
    %v1681 = vmul.f32 %v1666, %v1673
    %v1682 = vadd.f32 %v1680, %v1681
    %v1683 = vtanh.pop %v1682
    %v1684 = vmul.f32 %v1679, %v1683
    %1685 = vst [vmem:[#allocation13 + $0x28] sm:$0xff] %v1684
    %vm1686 = vcmp.eq.f32.partialorder %v839, 5.0
    %v1687 = vsel %vm1686, %v1684, 0.0
    %v1688 = vadd.f32 %v1573, %v1687
    %v1689 = vpack.c.bf16 %v1684, %v1684
    %1690 = vmatprep.subr.bf16.mxu0 %v937
    %1691 = vmatpush1.bf16.msra.mxu0 %v936
    %1692 = vmatprep.subr.bf16.mxu0 %v941
    %1693 = vmatpush1.bf16.msra.mxu0 %v940
    %1694 = vmatprep.subr.bf16.mxu0 %v945
    %1695 = vmatpush1.bf16.msra.mxu0 %v944
    %1696 = vmatprep.subr.bf16.mxu0 %v949
    %1697 = vmatpush1.bf16.msra.mxu0 %v948
    %1698 = vmatprep.subr.bf16.mxu0 %v953
    %1699 = vmatpush1.bf16.msra.mxu0 %v952
    %1700 = vmatprep.subr.bf16.mxu0 %v957
    %1701 = vmatpush1.bf16.msra.mxu0 %v956
    %1702 = vmatprep.subr.bf16.mxu0 %v961
    %1703 = vmatpush1.bf16.msra.mxu0 %v960
    %1704 = vmatprep.subr.bf16.mxu0 %v965
    %1705 = vmatpush1.bf16.msra.mxu0 %v964
    %1706 = vmatprep.subr.bf16.mxu0 0
    %1707 = vmatpush1.bf16.msra.mxu0 0
    %1708 = vmatprep.subr.bf16.mxu0 0
    %1709 = vmatpush1.bf16.msra.mxu0 0
    %1710 = vmatprep.subr.bf16.mxu0 0
    %1711 = vmatpush1.bf16.msra.mxu0 0
    %1712 = vmatprep.subr.bf16.mxu0 0
    %1713 = vmatpush1.bf16.msra.mxu0 0
    %1714 = vmatprep.subr.bf16.mxu0 0
    %1715 = vmatpush1.bf16.msra.mxu0 0
    %1716 = vmatprep.subr.bf16.mxu0 0
    %1717 = vmatpush1.bf16.msra.mxu0 0
    %1718 = vmatprep.subr.bf16.mxu0 0
    %1719 = vmatpush1.bf16.msra.mxu0 0
    %1720 = vmatprep.subr.bf16.mxu0 0
    %1721 = vmatpush1.bf16.msra.mxu0 0
    %1722 = vmatprep.mubr.bf16.mxu0 0
    %1723 = vmatmul.mubr.bf16.gmra.mrb[0].mxu0 %v1689
    %v1724 = vpop.f32.mrb[0].mxu0
    %v1725 = vadd.f32 0.0, %v1724
    %v1726 = vpop.f32.mrb[0].mxu0
    %v1727 = vadd.f32 0.0, %v1726
    %v1728 = vpop.f32.mrb[0].mxu0
    %v1729 = vpop.f32.mrb[0].mxu0
    %1730 = vdwg.mxu0
    %1731 = vmatprep.subr.bf16.mxu0 %v939
    %1732 = vmatpush1.bf16.msra.mxu0 %v938
    %1733 = vmatprep.subr.bf16.mxu0 %v943
    %1734 = vmatpush1.bf16.msra.mxu0 %v942
    %1735 = vmatprep.subr.bf16.mxu0 %v947
    %1736 = vmatpush1.bf16.msra.mxu0 %v946
    %1737 = vmatprep.subr.bf16.mxu0 %v951
    %1738 = vmatpush1.bf16.msra.mxu0 %v950
    %1739 = vmatprep.subr.bf16.mxu0 %v955
    %1740 = vmatpush1.bf16.msra.mxu0 %v954
    %1741 = vmatprep.subr.bf16.mxu0 %v959
    %1742 = vmatpush1.bf16.msra.mxu0 %v958
    %1743 = vmatprep.subr.bf16.mxu0 %v963
    %1744 = vmatpush1.bf16.msra.mxu0 %v962
    %1745 = vmatprep.subr.bf16.mxu0 %v967
    %1746 = vmatpush1.bf16.msra.mxu0 %v966
    %1747 = vmatprep.subr.bf16.mxu0 0
    %1748 = vmatpush1.bf16.msra.mxu0 0
    %1749 = vmatprep.subr.bf16.mxu0 0
    %1750 = vmatpush1.bf16.msra.mxu0 0
    %1751 = vmatprep.subr.bf16.mxu0 0
    %1752 = vmatpush1.bf16.msra.mxu0 0
    %1753 = vmatprep.subr.bf16.mxu0 0
    %1754 = vmatpush1.bf16.msra.mxu0 0
    %1755 = vmatprep.subr.bf16.mxu0 0
    %1756 = vmatpush1.bf16.msra.mxu0 0
    %1757 = vmatprep.subr.bf16.mxu0 0
    %1758 = vmatpush1.bf16.msra.mxu0 0
    %1759 = vmatprep.subr.bf16.mxu0 0
    %1760 = vmatpush1.bf16.msra.mxu0 0
    %1761 = vmatprep.subr.bf16.mxu0 0
    %1762 = vmatpush1.bf16.msra.mxu0 0
    %1763 = vmatprep.mubr.bf16.mxu0 0
    %1764 = vmatmul.mubr.bf16.gmra.mrb[0].mxu0 %v1689
    %v1765 = vpop.f32.mrb[0].mxu0
    %v1766 = vadd.f32 0.0, %v1765
    %v1767 = vpop.f32.mrb[0].mxu0
    %v1768 = vadd.f32 0.0, %v1767
    %v1769 = vpop.f32.mrb[0].mxu0
    %v1770 = vpop.f32.mrb[0].mxu0
    %1771 = vdwg.mxu0
    %v1772 = vadd.f32 %v726, %v1725
    %v1773 = vadd.f32 %v728, %v1727
    %v1774 = vadd.f32 %v799, %v1766
    %v1775 = vadd.f32 %v801, %v1768
    %v1776 = vsub.f32 0.0, %v1772
    %v1777 = vmul.f32 %v1776, 1.442695
    %v1778 = vpow.pop %v1777
    %v1779 = vadd.f32 %v1778, 1.0
    %v1780 = vrcp.pop %v1779
    %v1781 = vmul.f32 1.0, %v1780
    %v1782 = vsub.f32 0.0, %v1773
    %v1783 = vmul.f32 %v1782, 1.442695
    %v1784 = vpow.pop %v1783
    %v1785 = vadd.f32 %v1784, 1.0
    %v1786 = vrcp.pop %v1785
    %v1787 = vmul.f32 1.0, %v1786
    %v1788 = vtanh.pop %v1774
    %v1789 = vsub.f32 0.0, %v1775
    %v1790 = vmul.f32 %v1789, 1.442695
    %v1791 = vpow.pop %v1790
    %v1792 = vadd.f32 %v1791, 1.0
    %v1793 = vrcp.pop %v1792
    %v1794 = vmul.f32 1.0, %v1793
    %v1795 = vmul.f32 %v1787, %v1682
    %v1796 = vmul.f32 %v1781, %v1788
    %v1797 = vadd.f32 %v1795, %v1796
    %v1798 = vtanh.pop %v1797
    %v1799 = vmul.f32 %v1794, %v1798
    %1800 = vst [vmem:[#allocation13 + $0x30] sm:$0xff] %v1799
    %vm1801 = vcmp.eq.f32.partialorder %v839, 6.0
    %v1802 = vsel %vm1801, %v1799, 0.0
    %v1803 = vadd.f32 %v1688, %v1802
    %v1804 = vpack.c.bf16 %v1799, %v1799
    %1805 = vmatprep.subr.bf16.mxu0 %v937
    %1806 = vmatpush1.bf16.msra.mxu0 %v936
    %1807 = vmatprep.subr.bf16.mxu0 %v941
    %1808 = vmatpush1.bf16.msra.mxu0 %v940
    %1809 = vmatprep.subr.bf16.mxu0 %v945
    %1810 = vmatpush1.bf16.msra.mxu0 %v944
    %1811 = vmatprep.subr.bf16.mxu0 %v949
    %1812 = vmatpush1.bf16.msra.mxu0 %v948
    %1813 = vmatprep.subr.bf16.mxu0 %v953
    %1814 = vmatpush1.bf16.msra.mxu0 %v952
    %1815 = vmatprep.subr.bf16.mxu0 %v957
    %1816 = vmatpush1.bf16.msra.mxu0 %v956
    %1817 = vmatprep.subr.bf16.mxu0 %v961
    %1818 = vmatpush1.bf16.msra.mxu0 %v960
    %1819 = vmatprep.subr.bf16.mxu0 %v965
    %1820 = vmatpush1.bf16.msra.mxu0 %v964
    %1821 = vmatprep.subr.bf16.mxu0 0
    %1822 = vmatpush1.bf16.msra.mxu0 0
    %1823 = vmatprep.subr.bf16.mxu0 0
    %1824 = vmatpush1.bf16.msra.mxu0 0
    %1825 = vmatprep.subr.bf16.mxu0 0
    %1826 = vmatpush1.bf16.msra.mxu0 0
    %1827 = vmatprep.subr.bf16.mxu0 0
    %1828 = vmatpush1.bf16.msra.mxu0 0
    %1829 = vmatprep.subr.bf16.mxu0 0
    %1830 = vmatpush1.bf16.msra.mxu0 0
    %1831 = vmatprep.subr.bf16.mxu0 0
    %1832 = vmatpush1.bf16.msra.mxu0 0
    %1833 = vmatprep.subr.bf16.mxu0 0
    %1834 = vmatpush1.bf16.msra.mxu0 0
    %1835 = vmatprep.subr.bf16.mxu0 0
    %1836 = vmatpush1.bf16.msra.mxu0 0
    %1837 = vmatprep.mubr.bf16.mxu0 0
    %1838 = vmatmul.mubr.bf16.gmra.mrb[0].mxu0 %v1804
    %v1839 = vpop.f32.mrb[0].mxu0
    %v1840 = vadd.f32 0.0, %v1839
    %v1841 = vpop.f32.mrb[0].mxu0
    %v1842 = vadd.f32 0.0, %v1841
    %v1843 = vpop.f32.mrb[0].mxu0
    %v1844 = vpop.f32.mrb[0].mxu0
    %1845 = vdwg.mxu0
    %1846 = vmatprep.subr.bf16.mxu0 %v939
    %1847 = vmatpush1.bf16.msra.mxu0 %v938
    %1848 = vmatprep.subr.bf16.mxu0 %v943
    %1849 = vmatpush1.bf16.msra.mxu0 %v942
    %1850 = vmatprep.subr.bf16.mxu0 %v947
    %1851 = vmatpush1.bf16.msra.mxu0 %v946
    %1852 = vmatprep.subr.bf16.mxu0 %v951
    %1853 = vmatpush1.bf16.msra.mxu0 %v950
    %1854 = vmatprep.subr.bf16.mxu0 %v955
    %1855 = vmatpush1.bf16.msra.mxu0 %v954
    %1856 = vmatprep.subr.bf16.mxu0 %v959
    %1857 = vmatpush1.bf16.msra.mxu0 %v958
    %1858 = vmatprep.subr.bf16.mxu0 %v963
    %1859 = vmatpush1.bf16.msra.mxu0 %v962
    %1860 = vmatprep.subr.bf16.mxu0 %v967
    %1861 = vmatpush1.bf16.msra.mxu0 %v966
    %1862 = vmatprep.subr.bf16.mxu0 0
    %1863 = vmatpush1.bf16.msra.mxu0 0
    %1864 = vmatprep.subr.bf16.mxu0 0
    %1865 = vmatpush1.bf16.msra.mxu0 0
    %1866 = vmatprep.subr.bf16.mxu0 0
    %1867 = vmatpush1.bf16.msra.mxu0 0
    %1868 = vmatprep.subr.bf16.mxu0 0
    %1869 = vmatpush1.bf16.msra.mxu0 0
    %1870 = vmatprep.subr.bf16.mxu0 0
    %1871 = vmatpush1.bf16.msra.mxu0 0
    %1872 = vmatprep.subr.bf16.mxu0 0
    %1873 = vmatpush1.bf16.msra.mxu0 0
    %1874 = vmatprep.subr.bf16.mxu0 0
    %1875 = vmatpush1.bf16.msra.mxu0 0
    %1876 = vmatprep.subr.bf16.mxu0 0
    %1877 = vmatpush1.bf16.msra.mxu0 0
    %1878 = vmatprep.mubr.bf16.mxu0 0
    %1879 = vmatmul.mubr.bf16.gmra.mrb[0].mxu0 %v1804
    %v1880 = vpop.f32.mrb[0].mxu0
    %v1881 = vadd.f32 0.0, %v1880
    %v1882 = vpop.f32.mrb[0].mxu0
    %v1883 = vadd.f32 0.0, %v1882
    %v1884 = vpop.f32.mrb[0].mxu0
    %v1885 = vpop.f32.mrb[0].mxu0
    %1886 = vdwg.mxu0
    %v1887 = vadd.f32 %v730, %v1840
    %v1888 = vadd.f32 %v732, %v1842
    %v1889 = vadd.f32 %v803, %v1881
    %v1890 = vadd.f32 %v805, %v1883
    %v1891 = vsub.f32 0.0, %v1887
    %v1892 = vmul.f32 %v1891, 1.442695
    %v1893 = vpow.pop %v1892
    %v1894 = vadd.f32 %v1893, 1.0
    %v1895 = vrcp.pop %v1894
    %v1896 = vmul.f32 1.0, %v1895
    %v1897 = vsub.f32 0.0, %v1888
    %v1898 = vmul.f32 %v1897, 1.442695
    %v1899 = vpow.pop %v1898
    %v1900 = vadd.f32 %v1899, 1.0
    %v1901 = vrcp.pop %v1900
    %v1902 = vmul.f32 1.0, %v1901
    %v1903 = vtanh.pop %v1889
    %v1904 = vsub.f32 0.0, %v1890
    %v1905 = vmul.f32 %v1904, 1.442695
    %v1906 = vpow.pop %v1905
    %v1907 = vadd.f32 %v1906, 1.0
    %v1908 = vrcp.pop %v1907
    %v1909 = vmul.f32 1.0, %v1908
    %v1910 = vmul.f32 %v1902, %v1797
    %v1911 = vmul.f32 %v1896, %v1903
    %v1912 = vadd.f32 %v1910, %v1911
    %v1913 = vtanh.pop %v1912
    %v1914 = vmul.f32 %v1909, %v1913
    %1915 = vst [vmem:[#allocation13 + $0x38] sm:$0xff] %v1914
    %vm1916 = vcmp.eq.f32.partialorder %v839, 7.0
    %v1917 = vsel %vm1916, %v1914, 0.0
    %v1918 = vadd.f32 %v1803, %v1917
    %v1919 = vld [vmem:[#allocation11] sm:$0xf]
    %v1920 = vld [vmem:[#allocation11 + $0x4] sm:$0xf]
    %v1921 = vld [vmem:[#allocation11 + $0x8] sm:$0xf]
    %v1922 = vld [vmem:[#allocation11 + $0xc] sm:$0xf]
    %v1923 = vld [vmem:[#allocation11 + $0x10] sm:$0xf]
    %v1924 = vld [vmem:[#allocation11 + $0x14] sm:$0xf]
    %v1925 = vld [vmem:[#allocation11 + $0x18] sm:$0xf]
    %v1926 = vld [vmem:[#allocation11 + $0x1c] sm:$0xf]
    %v1927 = vld [vmem:[#allocation11 + $0x20] sm:$0xf]
    %v1928 = vld [vmem:[#allocation11 + $0x24] sm:$0xf]
    %v1929 = vld [vmem:[#allocation11 + $0x28] sm:$0xf]
    %v1930 = vld [vmem:[#allocation11 + $0x2c] sm:$0xf]
    %v1931 = vld [vmem:[#allocation11 + $0x30] sm:$0xf]
    %v1932 = vld [vmem:[#allocation11 + $0x34] sm:$0xf]
    %v1933 = vld [vmem:[#allocation11 + $0x38] sm:$0xf]
    %v1934 = vld [vmem:[#allocation11 + $0x3c] sm:$0xf]
    %v1935 = vpack.c.bf16 %v1918, %v1918
    %v1936 = vld [vmem:[%s8] sm:$0x1]
    %v1938 = vlaneseq
    %v1939 = vshrl.u32 %v1938, 7
    %v1940 = vsub.s32 0, %v1939
    %v1941 = vrot.slane %v1936, %v1940
    %v1959 = vunpack.c.l.b16 %v1919
    %v1960 = vunpack.c.l.b16 %v1920
    %v1961 = vunpack.c.l.b16 %v1921
    %v1962 = vunpack.c.l.b16 %v1922
    %v1963 = vunpack.c.l.b16 %v1923
    %v1964 = vunpack.c.l.b16 %v1924
    %v1965 = vunpack.c.l.b16 %v1925
    %v1966 = vunpack.c.l.b16 %v1926
    %v1967 = vunpack.c.l.b16 %v1927
    %v1968 = vunpack.c.l.b16 %v1928
    %v1969 = vunpack.c.l.b16 %v1929
    %v1970 = vunpack.c.l.b16 %v1930
    %v1971 = vunpack.c.l.b16 %v1931
    %v1972 = vunpack.c.l.b16 %v1932
    %v1973 = vunpack.c.l.b16 %v1933
    %v1974 = vunpack.c.l.b16 %v1934
    %v1975 = vpack.c.b16 %v1960, %v1959
    %v1976 = vpack.c.b16 %v1962, %v1961
    %v1977 = vpack.c.b16 %v1964, %v1963
    %v1978 = vpack.c.b16 %v1966, %v1965
    %v1979 = vpack.c.b16 %v1968, %v1967
    %v1980 = vpack.c.b16 %v1970, %v1969
    %v1981 = vpack.c.b16 %v1972, %v1971
    %v1982 = vpack.c.b16 %v1974, %v1973
    %1991 = vmatprep.subr.bf16.mxu0 0
    %1992 = vmatpush1.bf16.msra.mxu0 %v1975
    %1993 = vmatprep.subr.bf16.mxu0 0
    %1994 = vmatpush1.bf16.msra.mxu0 %v1976
    %1995 = vmatprep.subr.bf16.mxu0 0
    %1996 = vmatpush1.bf16.msra.mxu0 %v1977
    %1997 = vmatprep.subr.bf16.mxu0 0
    %1998 = vmatpush1.bf16.msra.mxu0 %v1978
    %1999 = vmatprep.subr.bf16.mxu0 0
    %2000 = vmatpush1.bf16.msra.mxu0 %v1979
    %2001 = vmatprep.subr.bf16.mxu0 0
    %2002 = vmatpush1.bf16.msra.mxu0 %v1980
    %2003 = vmatprep.subr.bf16.mxu0 0
    %2004 = vmatpush1.bf16.msra.mxu0 %v1981
    %2005 = vmatprep.subr.bf16.mxu0 0
    %2006 = vmatpush1.bf16.msra.mxu0 %v1982
    %2007 = vmatprep.subr.bf16.mxu0 0
    %2008 = vmatpush1.bf16.msra.mxu0 0
    %2009 = vmatprep.subr.bf16.mxu0 0
    %2010 = vmatpush1.bf16.msra.mxu0 0
    %2011 = vmatprep.subr.bf16.mxu0 0
    %2012 = vmatpush1.bf16.msra.mxu0 0
    %2013 = vmatprep.subr.bf16.mxu0 0
    %2014 = vmatpush1.bf16.msra.mxu0 0
    %2015 = vmatprep.subr.bf16.mxu0 0
    %2016 = vmatpush1.bf16.msra.mxu0 0
    %2017 = vmatprep.subr.bf16.mxu0 0
    %2018 = vmatpush1.bf16.msra.mxu0 0
    %2019 = vmatprep.subr.bf16.mxu0 0
    %2020 = vmatpush1.bf16.msra.mxu0 0
    %2021 = vmatprep.subr.bf16.mxu0 0
    %2022 = vmatpush1.bf16.msra.mxu0 0
    %2023 = vmatprep.mubr.bf16.mxu0 0
    %2024 = vmatmul.mubr.bf16.gmra.mrb[0].mxu0 %v1935
    %v2025 = vpop.f32.mrb[0].mxu0
    %v2026 = vadd.f32 %v1941, %v2025
    %v2027 = vpop.f32.mrb[0].mxu0
    %v2028 = vpop.f32.mrb[0].mxu0
    %v2029 = vpop.f32.mrb[0].mxu0
    %2030 = vdwg.mxu0
    %v2031 = vlaneseq
    %v2032 = vand.u32 %v2031, 127
    %v2033 = vmax.f32 %v2026, 0.0
    %v2034 = vand.u32 2147483647, %v2026
    %v2035 = vsub.f32 0.0, %v2034
    %v2036 = vmul.f32 %v2035, 1.442695
    %v2037 = vpow.pop %v2036
    %v2038 = vadd.f32 %v2037, 1.0
    %v2039 = vlog2.pop %v2038
    %v2040 = vmul.f32 %v2039, 0.6931472
    %v2041 = vadd.f32 %v2033, %v2040
    %v2042 = vmax.f32 %v2041, 1e-07
    %v2043 = vrsqrt.pop %v2042
    %v2044 = vmul.f32 %v2042, %v2043
    %vm2045 = vcmp.eq.f32.partialorder %v2042, inf
    %v2046 = vsel %vm2045, %v2042, %v2044
    %vm2047 = vcmp.eq.f32.partialorder %v2042, 0.0
    %v2048 = vand.u32 %v2042, 2147483648
    %v2049 = vsel %vm2047, %v2048, %v2046
    %vm2050 = vcmp.lt.s32.totalorder %v2032, 8
    %vm2051 = vcmp.lt.s32.totalorder %v2032, 16
    %v2052 = vsel %vm2051, %v2049, 0.0
    %v2053 = vsel %vm2050, %v2026, %v2052
    %2054 = vst [vmem:[#allocation14] sm:$0xff] %v2053
    // Predicated region
    $region62: #{tpu_custom_call.1} parent=1 // pred_check
      _
    $region63: #{tpu_custom_call.1} parent=1 // pred_check_branch
      %2056 = sbr.rel (0) target = $region65
    $region64: #{tpu_custom_call.1} parent=1 // pred_region
      %s2058 = ssub.s32 1024, 1024
      %2059 = vsyncadd [#allocation4], %s2058
      %s2060 = sshll.u32 [#allocation13], 4
      %s2061 = int_to_ptr.vmem [resolvable:$true] %s2060
      %2066 = dma.vmem_to_hbm [thread:$0]  %s2061, 1024, %s9, [#allocation4], 128, 128, 8
    $region65: #{tpu_custom_call.1} parent=1 // pred_fallthru
      _
    // Predicated region
    $region66: #{tpu_custom_call.1} parent=1 // pred_check
      _
    $region67: #{tpu_custom_call.1} parent=1 // pred_check_branch
      %2068 = sbr.rel (0) target = $region69
    $region68: #{tpu_custom_call.1} parent=1 // pred_region
      %s2070 = ssub.s32 128, 128
      %2071 = vsyncadd [#allocation15], %s2070
      %s2073 = sshll.u32 [#allocation14], 4
      %s2074 = int_to_ptr.vmem [resolvable:$true] %s2073
      %2076 = dma.vmem_to_hbm [thread:$0]  %s2074, 128, %s10, [#allocation15]
    $region69: #{tpu_custom_call.1} parent=1 // pred_fallthru
      _
    // Predicated region
    $region70: #{tpu_custom_call.1} parent=1 // pred_check
      _
    $region71: #{tpu_custom_call.1} parent=1 // pred_check_branch
      %2078 = sbr.rel (0) target = $region73
    $region72: #{tpu_custom_call.1} parent=1 // pred_region
      %2079 = dma.done [#allocation4], 1024
    $region73: #{tpu_custom_call.1} parent=1 // pred_fallthru
      _
    // Predicated region
    $region74: #{tpu_custom_call.1} parent=1 // pred_check
      _
    $region75: #{tpu_custom_call.1} parent=1 // pred_check_branch
      %2081 = sbr.rel (0) target = $region77
    $region76: #{tpu_custom_call.1} parent=1 // pred_region
      %2082 = dma.done [#allocation15], 128
    $region77: #{tpu_custom_call.1} parent=1 // pred_fallthru
      _
    %2083 = vsyncpa [#allocation3], 1
    %2084 = vsyncpa [#allocation6], 1
    %2085 = vsyncpa [#allocation9], 1
    %2086 = vsyncpa [#allocation12], 1
    %2087 = vsyncpa [#allocation4], 1
    %2088 = vsyncpa [#allocation15], 1

</llo_original>
